<compile_context>
chip_gen: v7x
topology: tpu7x:2x2x1
jax: 0.10.0
libtpu: 0.0.40
codegen_flags: <defaults>
</compile_context>

<pallas_src>
import jax
import jax.numpy as jnp
from jax import lax
from jax.experimental import pallas as pl
from jax.experimental.pallas import tpu as pltpu

HIDDEN = 32     # hidden_size
VOCAB = 128     # word_embedding.n_words()
T_STEPS = 8     # fused decode length for the demo


def decoder_decode_kernel(tok_ref, emb_ref, wih_ref, bih_ref, whh_ref, bhh_ref,
                          wout_ref, bout_ref, h0_ref,
                          logp_ref, hT_ref,
                          emb_proj_ref, h_scr_ref):
    T, V = logp_ref.shape
    H = hT_ref.shape[-1]

    # ---- one-time prolog (off the per-token critical path) ------------------
    # Precompute the input-side gate projection over the whole vocabulary:
    #   emb_proj[v] = relu(dropout(emb[v])) @ W_ih_cat + b_ih_cat   (eval: dropout = id)
    # One (V,H)x(H,3H) bf16 MXU dot with f32 accumulation (~0.8 MFLOP, 48 KB VMEM).
    # TODO(synk): training-mode dropout would draw a Bernoulli mask with
    #   pltpu.prng_seed / pltpu.prng_random_bits here (scaled by 1/(1-p)).
    x_all = jnp.maximum(emb_ref[...], 0)                     # (V, H) bf16 ReLU
    emb_proj_ref[...] = (
        jnp.dot(x_all, wih_ref[...], preferred_element_type=jnp.float32)
        + bih_ref[...])                                      # (V, 3H) f32, gates [r|z|n]

    # Hidden-path weights are tiny and stored f32; loaded ONCE, hoisted out of
    # the decode loop (no per-iteration slices / upcasts).
    whh = whh_ref[...]                                       # (H, 3H) f32
    bhh = bhh_ref[...]                                       # (1, 3H) f32

    # ---- serial decode recurrence (latency-bound path) ----------------------
    def step(t, h):
        tok = tok_ref[t]                                     # scalar read from SMEM
        gi = emb_proj_ref[pl.ds(tok, 1), :]                  # (1, 3H) row gather, no MXU
        gh = jnp.dot(h, whh, preferred_element_type=jnp.float32) + bhh   # single fused dot
        r = jax.nn.sigmoid(gi[:, 0:H] + gh[:, 0:H])
        z = jax.nn.sigmoid(gi[:, H:2 * H] + gh[:, H:2 * H])
        # b_hh_n stays inside r * gh_n (PyTorch nn.GRU semantics).
        n = jnp.tanh(gi[:, 2 * H:3 * H] + r * gh[:, 2 * H:3 * H])
        h_new = (1.0 - z) * n + z * h
        h_scr_ref[pl.ds(t, 1), :] = h_new                    # stash row for batched epilogue
        return h_new

    unroll = T if T <= 8 else 8      # cap unroll: keep LLO visibility w/o vreg blow-up
    h_final = lax.fori_loop(0, T, step, h0_ref[...], unroll=unroll)
    hT_ref[...] = h_final                                    # hidden written out once

    # ---- batched epilogue: one matmul, one log-softmax, one dense slab store
    h_all = h_scr_ref[...]                                   # (T, H) f32
    wout = wout_ref[...].astype(jnp.float32)                 # one-time, after the loop
    logits = jnp.dot(h_all, wout, preferred_element_type=jnp.float32) + bout_ref[...]
    m = jnp.max(logits, axis=-1, keepdims=True)
    lse = jnp.log(jnp.sum(jnp.exp(logits - m), axis=-1, keepdims=True)) + m
    logp_ref[...] = logits - lse                             # (T, V) lane/sublane-dense store


def decoder_rnn_decode(tokens, h0, emb, w_ih, b_ih, w_hh, b_hh, w_out, b_out):
    """Fused T-step decode. tokens: (T,) int32, h0: (1, H). Returns (logp (T, V), h_T (1, H))."""
    T = tokens.shape[0]
    V, H = emb.shape
    vmem = pl.BlockSpec(memory_space=pltpu.MemorySpace.VMEM)
    smem = pl.BlockSpec(memory_space=pltpu.MemorySpace.SMEM)

    flops = 2 * V * H * 3 * H + T * 2 * H * 3 * H + 2 * T * H * V
    transcendentals = T * (3 * H + V)
    bytes_accessed = int(sum(a.nbytes for a in
                             (tokens, emb, w_ih, b_ih, w_hh, b_hh, w_out, b_out, h0))
                         + T * V * 4 + H * 4)

    logp, h_t = pl.pallas_call(
        decoder_decode_kernel,
        out_shape=(
            jax.ShapeDtypeStruct((T, V), jnp.float32),
            jax.ShapeDtypeStruct((1, H), jnp.float32),
        ),
        in_specs=[smem] + [vmem] * 8,
        out_specs=(vmem, vmem),
        scratch_shapes=[
            pltpu.VMEM((V, 3 * H), jnp.float32),   # precomputed input-gate table
            pltpu.VMEM((T, H), jnp.float32),       # per-step hidden rows
        ],
        cost_estimate=pl.CostEstimate(flops=flops, transcendentals=transcendentals,
                                      bytes_accessed=bytes_accessed),
    )(tokens, emb, w_ih, b_ih, w_hh, b_hh, w_out, b_out, h0)
    return logp, h_t


def decoder_rnn_step(token, hidden, *params):
    """Single DecoderRNN.forward step (module-parity API) = fused decode with T=1."""
    tokens = jnp.reshape(jnp.asarray(token, jnp.int32), (1,))
    return decoder_rnn_decode(tokens, hidden, *params)


def make_params(key, hidden, vocab):
    ks = jax.random.split(key, 7)
    scale = 1.0 / float(hidden) ** 0.5
    # Embedding stored 2-D (V, H), bf16 -- lane-aligned rows, half the DMA bytes.
    emb = jax.random.normal(ks[0], (vocab, hidden), jnp.float32).astype(jnp.bfloat16)
    # Gate-concatenated [reset | update | new] layouts, pre-transposed to (in, out)
    # so every projection is one lane-dense matmul.
    w_ih = jax.random.uniform(ks[1], (hidden, 3 * hidden), jnp.float32, -scale, scale).astype(jnp.bfloat16)
    b_ih = jax.random.uniform(ks[2], (1, 3 * hidden), jnp.float32, -scale, scale)
    # Hidden-path weights kept f32 (tiny): avoids bf16 rounding drift in the recurrence.
    w_hh = jax.random.uniform(ks[3], (hidden, 3 * hidden), jnp.float32, -scale, scale)
    b_hh = jax.random.uniform(ks[4], (1, 3 * hidden), jnp.float32, -scale, scale)
    w_out = jax.random.uniform(ks[5], (hidden, vocab), jnp.float32, -scale, scale).astype(jnp.bfloat16)
    b_out = jax.random.uniform(ks[6], (1, vocab), jnp.float32, -scale, scale)
    return emb, w_ih, b_ih, w_hh, b_hh, w_out, b_out


def reference_decode(tokens, h0, emb, w_ih, b_ih, w_hh, b_hh, w_out, b_out):
    H = h0.shape[1]
    embf = emb.astype(jnp.float32)
    wih = w_ih.astype(jnp.float32)
    whh = w_hh.astype(jnp.float32)
    wout = w_out.astype(jnp.float32)

    def step(h, tok):
        x = jnp.maximum(embf[tok][None, :], 0.0)
        gi = x @ wih + b_ih
        gh = h @ whh + b_hh
        r = jax.nn.sigmoid(gi[:, 0:H] + gh[:, 0:H])
        z = jax.nn.sigmoid(gi[:, H:2 * H] + gh[:, H:2 * H])
        n = jnp.tanh(gi[:, 2 * H:] + r * gh[:, 2 * H:])
        h_new = (1.0 - z) * n + z * h
        logits = h_new @ wout + b_out
        return h_new, jax.nn.log_softmax(logits, axis=1)[0]

    hT, logps = lax.scan(step, h0, tokens)
    return logps, hT


if __name__ == "__main__":
    key = jax.random.PRNGKey(0)
    params = make_params(key, HIDDEN, VOCAB)

    tokens = jax.random.randint(jax.random.PRNGKey(1), (T_STEPS,), 0, VOCAB, dtype=jnp.int32)
    h0 = jnp.zeros((1, HIDDEN), jnp.float32)          # init_hidden()

    # Fused multi-step decode: one pallas_call, weights resident, h carried in-kernel.
    logp, hT = decoder_rnn_decode(tokens, h0, *params)
    jax.block_until_ready((logp, hT))

    ref_logp, ref_hT = reference_decode(tokens, h0, *params)
    assert logp.shape == (T_STEPS, VOCAB) and hT.shape == (1, HIDDEN)
    assert jnp.allclose(logp, ref_logp, atol=1e-3), "logp mismatch"
    assert jnp.allclose(hT, ref_hT, atol=1e-3), "hidden mismatch"

    # Single-step parity with the module's forward(input, hidden).
    logp1, h1 = decoder_rnn_step(tokens[0], h0, *params)
    jax.block_until_ready((logp1, h1))
    assert logp1.shape == (1, VOCAB) and h1.shape == (1, HIDDEN)
    assert jnp.allclose(logp1[0], ref_logp[0], atol=1e-3), "single-step logp mismatch"

    print("KERNEL_OK")
</pallas_src>

<mosaic_0001>
module attributes {stable_mosaic.version = 11 : i64} {
  func.func @decoder_decode_kernel(%arg0: memref<8xi32, #tpu.memory_space<smem>>, %arg1: memref<128x32xbf16, #tpu.memory_space<vmem>>, %arg2: memref<32x96xbf16, #tpu.memory_space<vmem>>, %arg3: memref<1x96xf32, #tpu.memory_space<vmem>>, %arg4: memref<32x96xf32, #tpu.memory_space<vmem>>, %arg5: memref<1x96xf32, #tpu.memory_space<vmem>>, %arg6: memref<32x128xbf16, #tpu.memory_space<vmem>>, %arg7: memref<1x128xf32, #tpu.memory_space<vmem>>, %arg8: memref<1x32xf32, #tpu.memory_space<vmem>>, %arg9: memref<8x128xf32, #tpu.memory_space<vmem>>, %arg10: memref<1x32xf32, #tpu.memory_space<vmem>>, %arg11: memref<128x96xf32, #tpu.memory_space<vmem>>, %arg12: memref<8x32xf32, #tpu.memory_space<vmem>>) attributes {dimension_semantics = [], scalar_prefetch = 0 : i64, scratch_operands = 2 : i64, tpu.core_type = #tpu.core_type<tc>} {
    %c0 = arith.constant 0 : index
    %c0_0 = arith.constant 0 : index
    %0 = vector.load %arg1[%c0, %c0_0] : memref<128x32xbf16, #tpu.memory_space<vmem>>, vector<128x32xbf16>
    %cst = arith.constant 0.000000e+00 : bf16
    %1 = vector.broadcast %cst : bf16 to vector<128x32xbf16>
    %2 = arith.maximumf %0, %1 : vector<128x32xbf16>
    %c0_1 = arith.constant 0 : index
    %c0_2 = arith.constant 0 : index
    %3 = vector.load %arg2[%c0_1, %c0_2] : memref<32x96xbf16, #tpu.memory_space<vmem>>, vector<32x96xbf16>
    %cst_3 = arith.constant dense<0.000000e+00> : vector<128x96xf32>
    %4 = tpu.matmul %2, %3, %cst_3 {dimension_numbers = #tpu.dot_dimension_numbers<[1], [0], [0], [1], [0, 0, 1, 1], [], []>} : vector<128x32xbf16>, vector<32x96xbf16>, vector<128x96xf32> -> vector<128x96xf32>
    %c0_4 = arith.constant 0 : index
    %c0_5 = arith.constant 0 : index
    %5 = vector.load %arg3[%c0_4, %c0_5] : memref<1x96xf32, #tpu.memory_space<vmem>>, vector<1x96xf32>
    %6 = vector.broadcast %5 : vector<1x96xf32> to vector<128x96xf32>
    %7 = arith.addf %4, %6 : vector<128x96xf32>
    %c0_6 = arith.constant 0 : index
    %c0_7 = arith.constant 0 : index
    %8 = vector.load %arg11[%c0_6, %c0_7] : memref<128x96xf32, #tpu.memory_space<vmem>>, vector<128x96xf32>
    tpu.vector_store %arg11[%c0_6, %c0_7], %7 {strides = array<i32>} : memref<128x96xf32, #tpu.memory_space<vmem>>, vector<128x96xf32>,
    %c0_8 = arith.constant 0 : index
    %c0_9 = arith.constant 0 : index
    %9 = vector.load %arg4[%c0_8, %c0_9] : memref<32x96xf32, #tpu.memory_space<vmem>>, vector<32x96xf32>
    %c0_10 = arith.constant 0 : index
    %c0_11 = arith.constant 0 : index
    %10 = vector.load %arg5[%c0_10, %c0_11] : memref<1x96xf32, #tpu.memory_space<vmem>>, vector<1x96xf32>
    %c0_12 = arith.constant 0 : index
    %c0_13 = arith.constant 0 : index
    %11 = vector.load %arg8[%c0_12, %c0_13] : memref<1x32xf32, #tpu.memory_space<vmem>>, vector<1x32xf32>
    %c0_i32 = arith.constant 0 : i32
    %12 = arith.index_cast %c0_i32 : i32 to index
    %13 = memref.load %arg0[%12] : memref<8xi32, #tpu.memory_space<smem>>
    %14 = arith.index_cast %13 : i32 to index
    %c0_14 = arith.constant 0 : index
    %15 = vector.load %arg11[%14, %c0_14] : memref<128x96xf32, #tpu.memory_space<vmem>>, vector<1x96xf32>
    %cst_15 = arith.constant dense<0.000000e+00> : vector<1x96xf32>
    %16 = tpu.matmul %11, %9, %cst_15 {dimension_numbers = #tpu.dot_dimension_numbers<[1], [0], [0], [1], [0, 0, 1, 1], [], []>} : vector<1x32xf32>, vector<32x96xf32>, vector<1x96xf32> -> vector<1x96xf32>
    %17 = arith.addf %16, %10 : vector<1x96xf32>
    %18 = vector.extract_strided_slice %15 {offsets = [0, 0], sizes = [1, 32], strides = [1, 1]} : vector<1x96xf32> to vector<1x32xf32>
    %19 = vector.extract_strided_slice %17 {offsets = [0, 0], sizes = [1, 32], strides = [1, 1]} : vector<1x96xf32> to vector<1x32xf32>
    %20 = arith.addf %18, %19 : vector<1x32xf32>
    %21 = arith.negf %20 : vector<1x32xf32>
    %22 = math.exp %21 : vector<1x32xf32>
    %cst_16 = arith.constant 1.000000e+00 : f32
    %23 = vector.broadcast %cst_16 : f32 to vector<1x32xf32>
    %24 = arith.addf %23, %22 : vector<1x32xf32>
    %25 = arith.divf %23, %24 : vector<1x32xf32>
    %26 = vector.extract_strided_slice %15 {offsets = [0, 32], sizes = [1, 32], strides = [1, 1]} : vector<1x96xf32> to vector<1x32xf32>
    %27 = vector.extract_strided_slice %17 {offsets = [0, 32], sizes = [1, 32], strides = [1, 1]} : vector<1x96xf32> to vector<1x32xf32>
    %28 = arith.addf %26, %27 : vector<1x32xf32>
    %29 = arith.negf %28 : vector<1x32xf32>
    %30 = math.exp %29 : vector<1x32xf32>
    %cst_17 = arith.constant 1.000000e+00 : f32
    %31 = vector.broadcast %cst_17 : f32 to vector<1x32xf32>
    %32 = arith.addf %31, %30 : vector<1x32xf32>
    %33 = arith.divf %31, %32 : vector<1x32xf32>
    %34 = vector.extract_strided_slice %15 {offsets = [0, 64], sizes = [1, 32], strides = [1, 1]} : vector<1x96xf32> to vector<1x32xf32>
    %35 = vector.extract_strided_slice %17 {offsets = [0, 64], sizes = [1, 32], strides = [1, 1]} : vector<1x96xf32> to vector<1x32xf32>
    %36 = arith.mulf %25, %35 : vector<1x32xf32>
    %37 = arith.addf %34, %36 : vector<1x32xf32>
    %38 = math.tanh %37 : vector<1x32xf32>
    %cst_18 = arith.constant 1.000000e+00 : f32
    %39 = vector.broadcast %cst_18 : f32 to vector<1x32xf32>
    %40 = arith.subf %39, %33 : vector<1x32xf32>
    %41 = arith.mulf %40, %38 : vector<1x32xf32>
    %42 = arith.mulf %33, %11 : vector<1x32xf32>
    %43 = arith.addf %41, %42 : vector<1x32xf32>
    %44 = arith.index_cast %c0_i32 : i32 to index
    %c0_19 = arith.constant 0 : index
    %45 = vector.load %arg12[%44, %c0_19] : memref<8x32xf32, #tpu.memory_space<vmem>>, vector<1x32xf32>
    tpu.vector_store %arg12[%44, %c0_19], %43 {strides = array<i32>} : memref<8x32xf32, #tpu.memory_space<vmem>>, vector<1x32xf32>,
    %c1_i32 = arith.constant 1 : i32
    %46 = arith.index_cast %c1_i32 : i32 to index
    %47 = memref.load %arg0[%46] : memref<8xi32, #tpu.memory_space<smem>>
    %48 = arith.index_cast %47 : i32 to index
    %c0_20 = arith.constant 0 : index
    %49 = vector.load %arg11[%48, %c0_20] : memref<128x96xf32, #tpu.memory_space<vmem>>, vector<1x96xf32>
    %cst_21 = arith.constant dense<0.000000e+00> : vector<1x96xf32>
    %50 = tpu.matmul %43, %9, %cst_21 {dimension_numbers = #tpu.dot_dimension_numbers<[1], [0], [0], [1], [0, 0, 1, 1], [], []>} : vector<1x32xf32>, vector<32x96xf32>, vector<1x96xf32> -> vector<1x96xf32>
    %51 = arith.addf %50, %10 : vector<1x96xf32>
    %52 = vector.extract_strided_slice %49 {offsets = [0, 0], sizes = [1, 32], strides = [1, 1]} : vector<1x96xf32> to vector<1x32xf32>
    %53 = vector.extract_strided_slice %51 {offsets = [0, 0], sizes = [1, 32], strides = [1, 1]} : vector<1x96xf32> to vector<1x32xf32>
    %54 = arith.addf %52, %53 : vector<1x32xf32>
    %55 = arith.negf %54 : vector<1x32xf32>
    %56 = math.exp %55 : vector<1x32xf32>
    %cst_22 = arith.constant 1.000000e+00 : f32
    %57 = vector.broadcast %cst_22 : f32 to vector<1x32xf32>
    %58 = arith.addf %57, %56 : vector<1x32xf32>
    %59 = arith.divf %57, %58 : vector<1x32xf32>
    %60 = vector.extract_strided_slice %49 {offsets = [0, 32], sizes = [1, 32], strides = [1, 1]} : vector<1x96xf32> to vector<1x32xf32>
    %61 = vector.extract_strided_slice %51 {offsets = [0, 32], sizes = [1, 32], strides = [1, 1]} : vector<1x96xf32> to vector<1x32xf32>
    %62 = arith.addf %60, %61 : vector<1x32xf32>
    %63 = arith.negf %62 : vector<1x32xf32>
    %64 = math.exp %63 : vector<1x32xf32>
    %cst_23 = arith.constant 1.000000e+00 : f32
    %65 = vector.broadcast %cst_23 : f32 to vector<1x32xf32>
    %66 = arith.addf %65, %64 : vector<1x32xf32>
    %67 = arith.divf %65, %66 : vector<1x32xf32>
    %68 = vector.extract_strided_slice %49 {offsets = [0, 64], sizes = [1, 32], strides = [1, 1]} : vector<1x96xf32> to vector<1x32xf32>
    %69 = vector.extract_strided_slice %51 {offsets = [0, 64], sizes = [1, 32], strides = [1, 1]} : vector<1x96xf32> to vector<1x32xf32>
    %70 = arith.mulf %59, %69 : vector<1x32xf32>
    %71 = arith.addf %68, %70 : vector<1x32xf32>
    %72 = math.tanh %71 : vector<1x32xf32>
    %cst_24 = arith.constant 1.000000e+00 : f32
    %73 = vector.broadcast %cst_24 : f32 to vector<1x32xf32>
    %74 = arith.subf %73, %67 : vector<1x32xf32>
    %75 = arith.mulf %74, %72 : vector<1x32xf32>
    %76 = arith.mulf %67, %43 : vector<1x32xf32>
    %77 = arith.addf %75, %76 : vector<1x32xf32>
    %78 = arith.index_cast %c1_i32 : i32 to index
    %c0_25 = arith.constant 0 : index
    %79 = vector.load %arg12[%78, %c0_25] : memref<8x32xf32, #tpu.memory_space<vmem>>, vector<1x32xf32>
    tpu.vector_store %arg12[%78, %c0_25], %77 {strides = array<i32>} : memref<8x32xf32, #tpu.memory_space<vmem>>, vector<1x32xf32>,
    %c2_i32 = arith.constant 2 : i32
    %80 = arith.index_cast %c2_i32 : i32 to index
    %81 = memref.load %arg0[%80] : memref<8xi32, #tpu.memory_space<smem>>
    %82 = arith.index_cast %81 : i32 to index
    %c0_26 = arith.constant 0 : index
    %83 = vector.load %arg11[%82, %c0_26] : memref<128x96xf32, #tpu.memory_space<vmem>>, vector<1x96xf32>
    %cst_27 = arith.constant dense<0.000000e+00> : vector<1x96xf32>
    %84 = tpu.matmul %77, %9, %cst_27 {dimension_numbers = #tpu.dot_dimension_numbers<[1], [0], [0], [1], [0, 0, 1, 1], [], []>} : vector<1x32xf32>, vector<32x96xf32>, vector<1x96xf32> -> vector<1x96xf32>
    %85 = arith.addf %84, %10 : vector<1x96xf32>
    %86 = vector.extract_strided_slice %83 {offsets = [0, 0], sizes = [1, 32], strides = [1, 1]} : vector<1x96xf32> to vector<1x32xf32>
    %87 = vector.extract_strided_slice %85 {offsets = [0, 0], sizes = [1, 32], strides = [1, 1]} : vector<1x96xf32> to vector<1x32xf32>
    %88 = arith.addf %86, %87 : vector<1x32xf32>
    %89 = arith.negf %88 : vector<1x32xf32>
    %90 = math.exp %89 : vector<1x32xf32>
    %cst_28 = arith.constant 1.000000e+00 : f32
    %91 = vector.broadcast %cst_28 : f32 to vector<1x32xf32>
    %92 = arith.addf %91, %90 : vector<1x32xf32>
    %93 = arith.divf %91, %92 : vector<1x32xf32>
    %94 = vector.extract_strided_slice %83 {offsets = [0, 32], sizes = [1, 32], strides = [1, 1]} : vector<1x96xf32> to vector<1x32xf32>
    %95 = vector.extract_strided_slice %85 {offsets = [0, 32], sizes = [1, 32], strides = [1, 1]} : vector<1x96xf32> to vector<1x32xf32>
    %96 = arith.addf %94, %95 : vector<1x32xf32>
    %97 = arith.negf %96 : vector<1x32xf32>
    %98 = math.exp %97 : vector<1x32xf32>
    %cst_29 = arith.constant 1.000000e+00 : f32
    %99 = vector.broadcast %cst_29 : f32 to vector<1x32xf32>
    %100 = arith.addf %99, %98 : vector<1x32xf32>
    %101 = arith.divf %99, %100 : vector<1x32xf32>
    %102 = vector.extract_strided_slice %83 {offsets = [0, 64], sizes = [1, 32], strides = [1, 1]} : vector<1x96xf32> to vector<1x32xf32>
    %103 = vector.extract_strided_slice %85 {offsets = [0, 64], sizes = [1, 32], strides = [1, 1]} : vector<1x96xf32> to vector<1x32xf32>
    %104 = arith.mulf %93, %103 : vector<1x32xf32>
    %105 = arith.addf %102, %104 : vector<1x32xf32>
    %106 = math.tanh %105 : vector<1x32xf32>
    %cst_30 = arith.constant 1.000000e+00 : f32
    %107 = vector.broadcast %cst_30 : f32 to vector<1x32xf32>
    %108 = arith.subf %107, %101 : vector<1x32xf32>
    %109 = arith.mulf %108, %106 : vector<1x32xf32>
    %110 = arith.mulf %101, %77 : vector<1x32xf32>
    %111 = arith.addf %109, %110 : vector<1x32xf32>
    %112 = arith.index_cast %c2_i32 : i32 to index
    %c0_31 = arith.constant 0 : index
    %113 = vector.load %arg12[%112, %c0_31] : memref<8x32xf32, #tpu.memory_space<vmem>>, vector<1x32xf32>
    tpu.vector_store %arg12[%112, %c0_31], %111 {strides = array<i32>} : memref<8x32xf32, #tpu.memory_space<vmem>>, vector<1x32xf32>,
    %c3_i32 = arith.constant 3 : i32
    %114 = arith.index_cast %c3_i32 : i32 to index
    %115 = memref.load %arg0[%114] : memref<8xi32, #tpu.memory_space<smem>>
    %116 = arith.index_cast %115 : i32 to index
    %c0_32 = arith.constant 0 : index
    %117 = vector.load %arg11[%116, %c0_32] : memref<128x96xf32, #tpu.memory_space<vmem>>, vector<1x96xf32>
    %cst_33 = arith.constant dense<0.000000e+00> : vector<1x96xf32>
    %118 = tpu.matmul %111, %9, %cst_33 {dimension_numbers = #tpu.dot_dimension_numbers<[1], [0], [0], [1], [0, 0, 1, 1], [], []>} : vector<1x32xf32>, vector<32x96xf32>, vector<1x96xf32> -> vector<1x96xf32>
    %119 = arith.addf %118, %10 : vector<1x96xf32>
    %120 = vector.extract_strided_slice %117 {offsets = [0, 0], sizes = [1, 32], strides = [1, 1]} : vector<1x96xf32> to vector<1x32xf32>
    %121 = vector.extract_strided_slice %119 {offsets = [0, 0], sizes = [1, 32], strides = [1, 1]} : vector<1x96xf32> to vector<1x32xf32>
    %122 = arith.addf %120, %121 : vector<1x32xf32>
    %123 = arith.negf %122 : vector<1x32xf32>
    %124 = math.exp %123 : vector<1x32xf32>
    %cst_34 = arith.constant 1.000000e+00 : f32
    %125 = vector.broadcast %cst_34 : f32 to vector<1x32xf32>
    %126 = arith.addf %125, %124 : vector<1x32xf32>
    %127 = arith.divf %125, %126 : vector<1x32xf32>
    %128 = vector.extract_strided_slice %117 {offsets = [0, 32], sizes = [1, 32], strides = [1, 1]} : vector<1x96xf32> to vector<1x32xf32>
    %129 = vector.extract_strided_slice %119 {offsets = [0, 32], sizes = [1, 32], strides = [1, 1]} : vector<1x96xf32> to vector<1x32xf32>
    %130 = arith.addf %128, %129 : vector<1x32xf32>
    %131 = arith.negf %130 : vector<1x32xf32>
    %132 = math.exp %131 : vector<1x32xf32>
    %cst_35 = arith.constant 1.000000e+00 : f32
    %133 = vector.broadcast %cst_35 : f32 to vector<1x32xf32>
    %134 = arith.addf %133, %132 : vector<1x32xf32>
    %135 = arith.divf %133, %134 : vector<1x32xf32>
    %136 = vector.extract_strided_slice %117 {offsets = [0, 64], sizes = [1, 32], strides = [1, 1]} : vector<1x96xf32> to vector<1x32xf32>
    %137 = vector.extract_strided_slice %119 {offsets = [0, 64], sizes = [1, 32], strides = [1, 1]} : vector<1x96xf32> to vector<1x32xf32>
    %138 = arith.mulf %127, %137 : vector<1x32xf32>
    %139 = arith.addf %136, %138 : vector<1x32xf32>
    %140 = math.tanh %139 : vector<1x32xf32>
    %cst_36 = arith.constant 1.000000e+00 : f32
    %141 = vector.broadcast %cst_36 : f32 to vector<1x32xf32>
    %142 = arith.subf %141, %135 : vector<1x32xf32>
    %143 = arith.mulf %142, %140 : vector<1x32xf32>
    %144 = arith.mulf %135, %111 : vector<1x32xf32>
    %145 = arith.addf %143, %144 : vector<1x32xf32>
    %146 = arith.index_cast %c3_i32 : i32 to index
    %c0_37 = arith.constant 0 : index
    %147 = vector.load %arg12[%146, %c0_37] : memref<8x32xf32, #tpu.memory_space<vmem>>, vector<1x32xf32>
    tpu.vector_store %arg12[%146, %c0_37], %145 {strides = array<i32>} : memref<8x32xf32, #tpu.memory_space<vmem>>, vector<1x32xf32>,
    %c4_i32 = arith.constant 4 : i32
    %148 = arith.index_cast %c4_i32 : i32 to index
    %149 = memref.load %arg0[%148] : memref<8xi32, #tpu.memory_space<smem>>
    %150 = arith.index_cast %149 : i32 to index
    %c0_38 = arith.constant 0 : index
    %151 = vector.load %arg11[%150, %c0_38] : memref<128x96xf32, #tpu.memory_space<vmem>>, vector<1x96xf32>
    %cst_39 = arith.constant dense<0.000000e+00> : vector<1x96xf32>
    %152 = tpu.matmul %145, %9, %cst_39 {dimension_numbers = #tpu.dot_dimension_numbers<[1], [0], [0], [1], [0, 0, 1, 1], [], []>} : vector<1x32xf32>, vector<32x96xf32>, vector<1x96xf32> -> vector<1x96xf32>
    %153 = arith.addf %152, %10 : vector<1x96xf32>
    %154 = vector.extract_strided_slice %151 {offsets = [0, 0], sizes = [1, 32], strides = [1, 1]} : vector<1x96xf32> to vector<1x32xf32>
    %155 = vector.extract_strided_slice %153 {offsets = [0, 0], sizes = [1, 32], strides = [1, 1]} : vector<1x96xf32> to vector<1x32xf32>
    %156 = arith.addf %154, %155 : vector<1x32xf32>
    %157 = arith.negf %156 : vector<1x32xf32>
    %158 = math.exp %157 : vector<1x32xf32>
    %cst_40 = arith.constant 1.000000e+00 : f32
    %159 = vector.broadcast %cst_40 : f32 to vector<1x32xf32>
    %160 = arith.addf %159, %158 : vector<1x32xf32>
    %161 = arith.divf %159, %160 : vector<1x32xf32>
    %162 = vector.extract_strided_slice %151 {offsets = [0, 32], sizes = [1, 32], strides = [1, 1]} : vector<1x96xf32> to vector<1x32xf32>
    %163 = vector.extract_strided_slice %153 {offsets = [0, 32], sizes = [1, 32], strides = [1, 1]} : vector<1x96xf32> to vector<1x32xf32>
    %164 = arith.addf %162, %163 : vector<1x32xf32>
    %165 = arith.negf %164 : vector<1x32xf32>
    %166 = math.exp %165 : vector<1x32xf32>
    %cst_41 = arith.constant 1.000000e+00 : f32
    %167 = vector.broadcast %cst_41 : f32 to vector<1x32xf32>
    %168 = arith.addf %167, %166 : vector<1x32xf32>
    %169 = arith.divf %167, %168 : vector<1x32xf32>
    %170 = vector.extract_strided_slice %151 {offsets = [0, 64], sizes = [1, 32], strides = [1, 1]} : vector<1x96xf32> to vector<1x32xf32>
    %171 = vector.extract_strided_slice %153 {offsets = [0, 64], sizes = [1, 32], strides = [1, 1]} : vector<1x96xf32> to vector<1x32xf32>
    %172 = arith.mulf %161, %171 : vector<1x32xf32>
    %173 = arith.addf %170, %172 : vector<1x32xf32>
    %174 = math.tanh %173 : vector<1x32xf32>
    %cst_42 = arith.constant 1.000000e+00 : f32
    %175 = vector.broadcast %cst_42 : f32 to vector<1x32xf32>
    %176 = arith.subf %175, %169 : vector<1x32xf32>
    %177 = arith.mulf %176, %174 : vector<1x32xf32>
    %178 = arith.mulf %169, %145 : vector<1x32xf32>
    %179 = arith.addf %177, %178 : vector<1x32xf32>
    %180 = arith.index_cast %c4_i32 : i32 to index
    %c0_43 = arith.constant 0 : index
    %181 = vector.load %arg12[%180, %c0_43] : memref<8x32xf32, #tpu.memory_space<vmem>>, vector<1x32xf32>
    tpu.vector_store %arg12[%180, %c0_43], %179 {strides = array<i32>} : memref<8x32xf32, #tpu.memory_space<vmem>>, vector<1x32xf32>,
    %c5_i32 = arith.constant 5 : i32
    %182 = arith.index_cast %c5_i32 : i32 to index
    %183 = memref.load %arg0[%182] : memref<8xi32, #tpu.memory_space<smem>>
    %184 = arith.index_cast %183 : i32 to index
    %c0_44 = arith.constant 0 : index
    %185 = vector.load %arg11[%184, %c0_44] : memref<128x96xf32, #tpu.memory_space<vmem>>, vector<1x96xf32>
    %cst_45 = arith.constant dense<0.000000e+00> : vector<1x96xf32>
    %186 = tpu.matmul %179, %9, %cst_45 {dimension_numbers = #tpu.dot_dimension_numbers<[1], [0], [0], [1], [0, 0, 1, 1], [], []>} : vector<1x32xf32>, vector<32x96xf32>, vector<1x96xf32> -> vector<1x96xf32>
    %187 = arith.addf %186, %10 : vector<1x96xf32>
    %188 = vector.extract_strided_slice %185 {offsets = [0, 0], sizes = [1, 32], strides = [1, 1]} : vector<1x96xf32> to vector<1x32xf32>
    %189 = vector.extract_strided_slice %187 {offsets = [0, 0], sizes = [1, 32], strides = [1, 1]} : vector<1x96xf32> to vector<1x32xf32>
    %190 = arith.addf %188, %189 : vector<1x32xf32>
    %191 = arith.negf %190 : vector<1x32xf32>
    %192 = math.exp %191 : vector<1x32xf32>
    %cst_46 = arith.constant 1.000000e+00 : f32
    %193 = vector.broadcast %cst_46 : f32 to vector<1x32xf32>
    %194 = arith.addf %193, %192 : vector<1x32xf32>
    %195 = arith.divf %193, %194 : vector<1x32xf32>
    %196 = vector.extract_strided_slice %185 {offsets = [0, 32], sizes = [1, 32], strides = [1, 1]} : vector<1x96xf32> to vector<1x32xf32>
    %197 = vector.extract_strided_slice %187 {offsets = [0, 32], sizes = [1, 32], strides = [1, 1]} : vector<1x96xf32> to vector<1x32xf32>
    %198 = arith.addf %196, %197 : vector<1x32xf32>
    %199 = arith.negf %198 : vector<1x32xf32>
    %200 = math.exp %199 : vector<1x32xf32>
    %cst_47 = arith.constant 1.000000e+00 : f32
    %201 = vector.broadcast %cst_47 : f32 to vector<1x32xf32>
    %202 = arith.addf %201, %200 : vector<1x32xf32>
    %203 = arith.divf %201, %202 : vector<1x32xf32>
    %204 = vector.extract_strided_slice %185 {offsets = [0, 64], sizes = [1, 32], strides = [1, 1]} : vector<1x96xf32> to vector<1x32xf32>
    %205 = vector.extract_strided_slice %187 {offsets = [0, 64], sizes = [1, 32], strides = [1, 1]} : vector<1x96xf32> to vector<1x32xf32>
    %206 = arith.mulf %195, %205 : vector<1x32xf32>
    %207 = arith.addf %204, %206 : vector<1x32xf32>
    %208 = math.tanh %207 : vector<1x32xf32>
    %cst_48 = arith.constant 1.000000e+00 : f32
    %209 = vector.broadcast %cst_48 : f32 to vector<1x32xf32>
    %210 = arith.subf %209, %203 : vector<1x32xf32>
    %211 = arith.mulf %210, %208 : vector<1x32xf32>
    %212 = arith.mulf %203, %179 : vector<1x32xf32>
    %213 = arith.addf %211, %212 : vector<1x32xf32>
    %214 = arith.index_cast %c5_i32 : i32 to index
    %c0_49 = arith.constant 0 : index
    %215 = vector.load %arg12[%214, %c0_49] : memref<8x32xf32, #tpu.memory_space<vmem>>, vector<1x32xf32>
    tpu.vector_store %arg12[%214, %c0_49], %213 {strides = array<i32>} : memref<8x32xf32, #tpu.memory_space<vmem>>, vector<1x32xf32>,
    %c6_i32 = arith.constant 6 : i32
    %216 = arith.index_cast %c6_i32 : i32 to index
    %217 = memref.load %arg0[%216] : memref<8xi32, #tpu.memory_space<smem>>
    %218 = arith.index_cast %217 : i32 to index
    %c0_50 = arith.constant 0 : index
    %219 = vector.load %arg11[%218, %c0_50] : memref<128x96xf32, #tpu.memory_space<vmem>>, vector<1x96xf32>
    %cst_51 = arith.constant dense<0.000000e+00> : vector<1x96xf32>
    %220 = tpu.matmul %213, %9, %cst_51 {dimension_numbers = #tpu.dot_dimension_numbers<[1], [0], [0], [1], [0, 0, 1, 1], [], []>} : vector<1x32xf32>, vector<32x96xf32>, vector<1x96xf32> -> vector<1x96xf32>
    %221 = arith.addf %220, %10 : vector<1x96xf32>
    %222 = vector.extract_strided_slice %219 {offsets = [0, 0], sizes = [1, 32], strides = [1, 1]} : vector<1x96xf32> to vector<1x32xf32>
    %223 = vector.extract_strided_slice %221 {offsets = [0, 0], sizes = [1, 32], strides = [1, 1]} : vector<1x96xf32> to vector<1x32xf32>
    %224 = arith.addf %222, %223 : vector<1x32xf32>
    %225 = arith.negf %224 : vector<1x32xf32>
    %226 = math.exp %225 : vector<1x32xf32>
    %cst_52 = arith.constant 1.000000e+00 : f32
    %227 = vector.broadcast %cst_52 : f32 to vector<1x32xf32>
    %228 = arith.addf %227, %226 : vector<1x32xf32>
    %229 = arith.divf %227, %228 : vector<1x32xf32>
    %230 = vector.extract_strided_slice %219 {offsets = [0, 32], sizes = [1, 32], strides = [1, 1]} : vector<1x96xf32> to vector<1x32xf32>
    %231 = vector.extract_strided_slice %221 {offsets = [0, 32], sizes = [1, 32], strides = [1, 1]} : vector<1x96xf32> to vector<1x32xf32>
    %232 = arith.addf %230, %231 : vector<1x32xf32>
    %233 = arith.negf %232 : vector<1x32xf32>
    %234 = math.exp %233 : vector<1x32xf32>
    %cst_53 = arith.constant 1.000000e+00 : f32
    %235 = vector.broadcast %cst_53 : f32 to vector<1x32xf32>
    %236 = arith.addf %235, %234 : vector<1x32xf32>
    %237 = arith.divf %235, %236 : vector<1x32xf32>
    %238 = vector.extract_strided_slice %219 {offsets = [0, 64], sizes = [1, 32], strides = [1, 1]} : vector<1x96xf32> to vector<1x32xf32>
    %239 = vector.extract_strided_slice %221 {offsets = [0, 64], sizes = [1, 32], strides = [1, 1]} : vector<1x96xf32> to vector<1x32xf32>
    %240 = arith.mulf %229, %239 : vector<1x32xf32>
    %241 = arith.addf %238, %240 : vector<1x32xf32>
    %242 = math.tanh %241 : vector<1x32xf32>
    %cst_54 = arith.constant 1.000000e+00 : f32
    %243 = vector.broadcast %cst_54 : f32 to vector<1x32xf32>
    %244 = arith.subf %243, %237 : vector<1x32xf32>
    %245 = arith.mulf %244, %242 : vector<1x32xf32>
    %246 = arith.mulf %237, %213 : vector<1x32xf32>
    %247 = arith.addf %245, %246 : vector<1x32xf32>
    %248 = arith.index_cast %c6_i32 : i32 to index
    %c0_55 = arith.constant 0 : index
    %249 = vector.load %arg12[%248, %c0_55] : memref<8x32xf32, #tpu.memory_space<vmem>>, vector<1x32xf32>
    tpu.vector_store %arg12[%248, %c0_55], %247 {strides = array<i32>} : memref<8x32xf32, #tpu.memory_space<vmem>>, vector<1x32xf32>,
    %c7_i32 = arith.constant 7 : i32
    %250 = arith.index_cast %c7_i32 : i32 to index
    %251 = memref.load %arg0[%250] : memref<8xi32, #tpu.memory_space<smem>>
    %252 = arith.index_cast %251 : i32 to index
    %c0_56 = arith.constant 0 : index
    %253 = vector.load %arg11[%252, %c0_56] : memref<128x96xf32, #tpu.memory_space<vmem>>, vector<1x96xf32>
    %cst_57 = arith.constant dense<0.000000e+00> : vector<1x96xf32>
    %254 = tpu.matmul %247, %9, %cst_57 {dimension_numbers = #tpu.dot_dimension_numbers<[1], [0], [0], [1], [0, 0, 1, 1], [], []>} : vector<1x32xf32>, vector<32x96xf32>, vector<1x96xf32> -> vector<1x96xf32>
    %255 = arith.addf %254, %10 : vector<1x96xf32>
    %256 = vector.extract_strided_slice %253 {offsets = [0, 0], sizes = [1, 32], strides = [1, 1]} : vector<1x96xf32> to vector<1x32xf32>
    %257 = vector.extract_strided_slice %255 {offsets = [0, 0], sizes = [1, 32], strides = [1, 1]} : vector<1x96xf32> to vector<1x32xf32>
    %258 = arith.addf %256, %257 : vector<1x32xf32>
    %259 = arith.negf %258 : vector<1x32xf32>
    %260 = math.exp %259 : vector<1x32xf32>
    %cst_58 = arith.constant 1.000000e+00 : f32
    %261 = vector.broadcast %cst_58 : f32 to vector<1x32xf32>
    %262 = arith.addf %261, %260 : vector<1x32xf32>
    %263 = arith.divf %261, %262 : vector<1x32xf32>
    %264 = vector.extract_strided_slice %253 {offsets = [0, 32], sizes = [1, 32], strides = [1, 1]} : vector<1x96xf32> to vector<1x32xf32>
    %265 = vector.extract_strided_slice %255 {offsets = [0, 32], sizes = [1, 32], strides = [1, 1]} : vector<1x96xf32> to vector<1x32xf32>
    %266 = arith.addf %264, %265 : vector<1x32xf32>
    %267 = arith.negf %266 : vector<1x32xf32>
    %268 = math.exp %267 : vector<1x32xf32>
    %cst_59 = arith.constant 1.000000e+00 : f32
    %269 = vector.broadcast %cst_59 : f32 to vector<1x32xf32>
    %270 = arith.addf %269, %268 : vector<1x32xf32>
    %271 = arith.divf %269, %270 : vector<1x32xf32>
    %272 = vector.extract_strided_slice %253 {offsets = [0, 64], sizes = [1, 32], strides = [1, 1]} : vector<1x96xf32> to vector<1x32xf32>
    %273 = vector.extract_strided_slice %255 {offsets = [0, 64], sizes = [1, 32], strides = [1, 1]} : vector<1x96xf32> to vector<1x32xf32>
    %274 = arith.mulf %263, %273 : vector<1x32xf32>
    %275 = arith.addf %272, %274 : vector<1x32xf32>
    %276 = math.tanh %275 : vector<1x32xf32>
    %cst_60 = arith.constant 1.000000e+00 : f32
    %277 = vector.broadcast %cst_60 : f32 to vector<1x32xf32>
    %278 = arith.subf %277, %271 : vector<1x32xf32>
    %279 = arith.mulf %278, %276 : vector<1x32xf32>
    %280 = arith.mulf %271, %247 : vector<1x32xf32>
    %281 = arith.addf %279, %280 : vector<1x32xf32>
    %282 = arith.index_cast %c7_i32 : i32 to index
    %c0_61 = arith.constant 0 : index
    %283 = vector.load %arg12[%282, %c0_61] : memref<8x32xf32, #tpu.memory_space<vmem>>, vector<1x32xf32>
    tpu.vector_store %arg12[%282, %c0_61], %281 {strides = array<i32>} : memref<8x32xf32, #tpu.memory_space<vmem>>, vector<1x32xf32>,
    %c8_i32 = arith.constant 8 : i32
    %c0_62 = arith.constant 0 : index
    %c0_63 = arith.constant 0 : index
    %284 = vector.load %arg10[%c0_62, %c0_63] : memref<1x32xf32, #tpu.memory_space<vmem>>, vector<1x32xf32>
    tpu.vector_store %arg10[%c0_62, %c0_63], %281 {strides = array<i32>} : memref<1x32xf32, #tpu.memory_space<vmem>>, vector<1x32xf32>,
    %c0_64 = arith.constant 0 : index
    %c0_65 = arith.constant 0 : index
    %285 = vector.load %arg12[%c0_64, %c0_65] : memref<8x32xf32, #tpu.memory_space<vmem>>, vector<8x32xf32>
    %c0_66 = arith.constant 0 : index
    %c0_67 = arith.constant 0 : index
    %286 = vector.load %arg6[%c0_66, %c0_67] : memref<32x128xbf16, #tpu.memory_space<vmem>>, vector<32x128xbf16>
    %287 = arith.extf %286 : vector<32x128xbf16> to vector<32x128xf32>
    %cst_68 = arith.constant dense<0.000000e+00> : vector<8x128xf32>
    %288 = tpu.matmul %285, %287, %cst_68 {dimension_numbers = #tpu.dot_dimension_numbers<[1], [0], [0], [1], [0, 0, 1, 1], [], []>} : vector<8x32xf32>, vector<32x128xf32>, vector<8x128xf32> -> vector<8x128xf32>
    %c0_69 = arith.constant 0 : index
    %c0_70 = arith.constant 0 : index
    %289 = vector.load %arg7[%c0_69, %c0_70] : memref<1x128xf32, #tpu.memory_space<vmem>>, vector<1x128xf32>
    %290 = vector.broadcast %289 : vector<1x128xf32> to vector<8x128xf32>
    %291 = arith.addf %288, %290 : vector<8x128xf32>
    %cst_71 = arith.constant dense<0xFF800000> : vector<8xf32>
    %292 = vector.multi_reduction <maximumf>, %291, %cst_71 [1] : vector<8x128xf32> to vector<8xf32>
    %293 = vector.shape_cast %292 : vector<8xf32> to vector<8x1xf32>
    %294 = vector.broadcast %293 : vector<8x1xf32> to vector<8x128xf32>
    %295 = arith.subf %291, %294 : vector<8x128xf32>
    %296 = math.exp %295 : vector<8x128xf32>
    %cst_72 = arith.constant dense<0.000000e+00> : vector<8xf32>
    %297 = vector.multi_reduction <add>, %296, %cst_72 [1] : vector<8x128xf32> to vector<8xf32>
    %298 = vector.shape_cast %297 : vector<8xf32> to vector<8x1xf32>
    %299 = math.log %298 : vector<8x1xf32>
    %300 = arith.addf %299, %293 : vector<8x1xf32>
    %301 = vector.broadcast %300 : vector<8x1xf32> to vector<8x128xf32>
    %302 = arith.subf %291, %301 : vector<8x128xf32>
    %c0_73 = arith.constant 0 : index
    %c0_74 = arith.constant 0 : index
    %303 = vector.load %arg9[%c0_73, %c0_74] : memref<8x128xf32, #tpu.memory_space<vmem>>, vector<8x128xf32>
    tpu.vector_store %arg9[%c0_73, %c0_74], %302 {strides = array<i32>} : memref<8x128xf32, #tpu.memory_space<vmem>>, vector<8x128xf32>,
    return
  }
}

</mosaic_0001>

<llo_original>
// kernel: tpu_custom_call.1
$region0: #{tpu_custom_call.1}
  #allocation0 [shape = 'u32[]', space=smem, size = 0x4, offset = 0x4, fixed_abs, tag = 'smem constant byte address 0x4 - core index']
  #allocation1 [shape = 'u32[144,128]{1,0:T(1,128)}', space=vmem, size = 0x12000, scoped, tag = 'internal scratch']
  #allocation2 [shape = 'f32[128,96]{1,0:T(8,128)}', space=vmem, size = 0x10000, scoped, tag = 'scratch operand']
  #allocation3 [shape = 'f32[8,32]{1,0:T(8,128)}', space=vmem, size = 0x1000, scoped, tag = 'scratch operand']
  %s0 = inlined_call_operand.vmem [shape: s32[8], index: 0, kind: input, shape index: {}]
  %s1 = inlined_call_operand.vmem [shape: bf16[128,32], index: 1, kind: input, shape index: {}]
  %s2 = inlined_call_operand.vmem [shape: bf16[32,96], index: 2, kind: input, shape index: {}]
  %s3 = inlined_call_operand.vmem [shape: f32[1,96], index: 3, kind: input, shape index: {}]
  %s4 = inlined_call_operand.vmem [shape: f32[32,96], index: 4, kind: input, shape index: {}]
  %s5 = inlined_call_operand.vmem [shape: f32[1,96], index: 5, kind: input, shape index: {}]
  %s6 = inlined_call_operand.vmem [shape: bf16[32,128], index: 6, kind: input, shape index: {}]
  %s7 = inlined_call_operand.vmem [shape: f32[1,128], index: 7, kind: input, shape index: {}]
  %s8 = inlined_call_operand.vmem [shape: f32[1,32], index: 8, kind: input, shape index: {}]
  %s9 = inlined_call_operand.hbm [shape: f32[8,128], index: 9, kind: output, shape index: {0}]
  %s10 = inlined_call_operand.hbm [shape: f32[1,32], index: 10, kind: output, shape index: {1}]
  %11 = xla_tuple %s9, %s10
  %s12 = sld [smem:[#allocation0]]
  $region58: #{tpu_custom_call.1} parent=0
    _
  %s14 = ssub.s32 1, %s12
  %s15 = scalar_select 0, %s14, %s12
  $region1: #{tpu_custom_call.1} parent=0
    #allocation4 [shape = 'u8[512]{0}', space=smem, size = 0x200, scoped, tag = 'input window, operand 0, single buffered']
    #allocation5 [shape = 's32[1]{0}', space=sflag, size = 0x4, scoped, tag = 'scoped memory for tpu_custom_call.1']
    #allocation6 [shape = 's32[1]{0}', space=sflag, size = 0x4, scoped, tag = 'scoped memory for tpu_custom_call.1']
    #allocation7 [shape = 'u8[4096]{0}', space=vmem, size = 0x1000, scoped, tag = 'output window, operand 0, single buffered']
    #allocation8 [shape = 'u8[512]{0}', space=vmem, size = 0x400, scoped, tag = 'output window, operand 1, single buffered']
    #allocation9 [shape = 's32[1]{0}', space=sflag, size = 0x4, scoped, tag = 'scoped memory for tpu_custom_call.1']
    %16 = vsyncpa [#allocation6], 0
    %17 = vsyncpa [#allocation5], 0
    %18 = vsyncpa [#allocation9], 0
    // Predicated region
    $region2: #{tpu_custom_call.1} parent=1 // pred_check
      _
    $region3: #{tpu_custom_call.1} parent=1 // pred_check_branch
      %20 = sbr.rel (0) target = $region5
    $region4: #{tpu_custom_call.1} parent=1 // pred_region
      %s22 = ssub.s32 16, 16
      %23 = vsyncadd [#allocation6], %s22
      %s25 = sshll.u32 %s0, 4
      %s26 = int_to_ptr.vmem [resolvable:$true] %s25
      %28 = dma.vmem_to_smem %s26, 16, [#allocation4], [#allocation6]
    $region5: #{tpu_custom_call.1} parent=1 // pred_fallthru
      _
    // Predicated region
    $region6: #{tpu_custom_call.1} parent=1 // pred_check
      _
    $region7: #{tpu_custom_call.1} parent=1 // pred_check_branch
      %30 = sbr.rel (0) target = $region9
    $region8: #{tpu_custom_call.1} parent=1 // pred_region
      _
    $region9: #{tpu_custom_call.1} parent=1 // pred_fallthru
      _
    // Predicated region
    $region10: #{tpu_custom_call.1} parent=1 // pred_check
      _
    $region11: #{tpu_custom_call.1} parent=1 // pred_check_branch
      %32 = sbr.rel (0) target = $region13
    $region12: #{tpu_custom_call.1} parent=1 // pred_region
      _
    $region13: #{tpu_custom_call.1} parent=1 // pred_fallthru
      _
    // Predicated region
    $region14: #{tpu_custom_call.1} parent=1 // pred_check
      _
    $region15: #{tpu_custom_call.1} parent=1 // pred_check_branch
      %34 = sbr.rel (0) target = $region17
    $region16: #{tpu_custom_call.1} parent=1 // pred_region
      _
    $region17: #{tpu_custom_call.1} parent=1 // pred_fallthru
      _
    // Predicated region
    $region18: #{tpu_custom_call.1} parent=1 // pred_check
      _
    $region19: #{tpu_custom_call.1} parent=1 // pred_check_branch
      %36 = sbr.rel (0) target = $region21
    $region20: #{tpu_custom_call.1} parent=1 // pred_region
      _
    $region21: #{tpu_custom_call.1} parent=1 // pred_fallthru
      _
    // Predicated region
    $region22: #{tpu_custom_call.1} parent=1 // pred_check
      _
    $region23: #{tpu_custom_call.1} parent=1 // pred_check_branch
      %38 = sbr.rel (0) target = $region25
    $region24: #{tpu_custom_call.1} parent=1 // pred_region
      _
    $region25: #{tpu_custom_call.1} parent=1 // pred_fallthru
      _
    // Predicated region
    $region26: #{tpu_custom_call.1} parent=1 // pred_check
      _
    $region27: #{tpu_custom_call.1} parent=1 // pred_check_branch
      %40 = sbr.rel (0) target = $region29
    $region28: #{tpu_custom_call.1} parent=1 // pred_region
      _
    $region29: #{tpu_custom_call.1} parent=1 // pred_fallthru
      _
    // Predicated region
    $region30: #{tpu_custom_call.1} parent=1 // pred_check
      _
    $region31: #{tpu_custom_call.1} parent=1 // pred_check_branch
      %42 = sbr.rel (0) target = $region33
    $region32: #{tpu_custom_call.1} parent=1 // pred_region
      _
    $region33: #{tpu_custom_call.1} parent=1 // pred_fallthru
      _
    // Predicated region
    $region34: #{tpu_custom_call.1} parent=1 // pred_check
      _
    $region35: #{tpu_custom_call.1} parent=1 // pred_check_branch
      %44 = sbr.rel (0) target = $region37
    $region36: #{tpu_custom_call.1} parent=1 // pred_region
      _
    $region37: #{tpu_custom_call.1} parent=1 // pred_fallthru
      _
    // Predicated region
    $region38: #{tpu_custom_call.1} parent=1 // pred_check
      _
    $region39: #{tpu_custom_call.1} parent=1 // pred_check_branch
      %46 = sbr.rel (0) target = $region41
    $region40: #{tpu_custom_call.1} parent=1 // pred_region
      %47 = dma.done [#allocation6], 16
    $region41: #{tpu_custom_call.1} parent=1 // pred_fallthru
      _
    %48 = sfence
    %v50 = vld [vmem:[%s1] sm:$0xf]
    %v51 = vld [vmem:[%s1 + $0x4] sm:$0xf]
    %v52 = vld [vmem:[%s1 + $0x8] sm:$0xf]
    %v53 = vld [vmem:[%s1 + $0xc] sm:$0xf]
    %v54 = vld [vmem:[%s1 + $0x10] sm:$0xf]
    %v55 = vld [vmem:[%s1 + $0x14] sm:$0xf]
    %v56 = vld [vmem:[%s1 + $0x18] sm:$0xf]
    %v57 = vld [vmem:[%s1 + $0x1c] sm:$0xf]
    %v58 = vld [vmem:[%s1 + $0x20] sm:$0xf]
    %v59 = vld [vmem:[%s1 + $0x24] sm:$0xf]
    %v60 = vld [vmem:[%s1 + $0x28] sm:$0xf]
    %v61 = vld [vmem:[%s1 + $0x2c] sm:$0xf]
    %v62 = vld [vmem:[%s1 + $0x30] sm:$0xf]
    %v63 = vld [vmem:[%s1 + $0x34] sm:$0xf]
    %v64 = vld [vmem:[%s1 + $0x38] sm:$0xf]
    %v65 = vld [vmem:[%s1 + $0x3c] sm:$0xf]
    %v66 = vmax.bf16 %v50, 0
    %v67 = vmax.bf16 %v51, 0
    %v68 = vmax.bf16 %v52, 0
    %v69 = vmax.bf16 %v53, 0
    %v70 = vmax.bf16 %v54, 0
    %v71 = vmax.bf16 %v55, 0
    %v72 = vmax.bf16 %v56, 0
    %v73 = vmax.bf16 %v57, 0
    %v74 = vmax.bf16 %v58, 0
    %v75 = vmax.bf16 %v59, 0
    %v76 = vmax.bf16 %v60, 0
    %v77 = vmax.bf16 %v61, 0
    %v78 = vmax.bf16 %v62, 0
    %v79 = vmax.bf16 %v63, 0
    %v80 = vmax.bf16 %v64, 0
    %v81 = vmax.bf16 %v65, 0
    %v82 = vld [vmem:[%s2] sm:$0xf]
    %v83 = vld [vmem:[%s2 + $0x4] sm:$0xf]
    %v84 = vld [vmem:[%s2 + $0x8] sm:$0xf]
    %v85 = vld [vmem:[%s2 + $0xc] sm:$0xf]
    %v86 = vld [vmem:[%s3] sm:$0x1]
    %v88 = vlaneseq
    %v89 = vshrl.u32 %v88, 7
    %v90 = vsub.s32 0, %v89
    %v91 = vrot.slane %v86, %v90
    %v109 = vunpack.c.l.b16 %v66
    %v110 = vunpack.c.l.b16 %v67
    %v111 = vunpack.c.l.b16 %v68
    %v112 = vunpack.c.l.b16 %v69
    %v113 = vunpack.c.l.b16 %v70
    %v114 = vunpack.c.l.b16 %v71
    %v115 = vunpack.c.l.b16 %v72
    %v116 = vunpack.c.l.b16 %v73
    %v117 = vunpack.c.l.b16 %v74
    %v118 = vunpack.c.l.b16 %v75
    %v119 = vunpack.c.l.b16 %v76
    %v120 = vunpack.c.l.b16 %v77
    %v121 = vunpack.c.l.b16 %v78
    %v122 = vunpack.c.l.b16 %v79
    %v123 = vunpack.c.l.b16 %v80
    %v124 = vunpack.c.l.b16 %v81
    %v125 = vpack.c.b16 %v110, %v109
    %v126 = vpack.c.b16 %v112, %v111
    %v127 = vpack.c.b16 %v114, %v113
    %v128 = vpack.c.b16 %v116, %v115
    %v129 = vpack.c.b16 %v118, %v117
    %v130 = vpack.c.b16 %v120, %v119
    %v131 = vpack.c.b16 %v122, %v121
    %v132 = vpack.c.b16 %v124, %v123
    %v137 = vunpack.c.l.b16 %v82
    %v138 = vunpack.c.l.b16 %v83
    %v139 = vunpack.c.l.b16 %v84
    %v140 = vunpack.c.l.b16 %v85
    %v141 = vpack.c.b16 %v138, %v137
    %v142 = vpack.c.b16 %v140, %v139
    %vm145 = vcmask 261120
    %v147 = vsel %vm145, %v125, 0
    %v150 = vsel %vm145, %v126, 0
    %v153 = vsel %vm145, %v127, 0
    %v156 = vsel %vm145, %v128, 0
    %v159 = vsel %vm145, %v129, 0
    %v162 = vsel %vm145, %v130, 0
    %v165 = vsel %vm145, %v131, 0
    %v168 = vsel %vm145, %v132, 0
    %170 = vmatprep.subr.bf16.mxu0 0
    %171 = vmatpush1.bf16.msra.mxu0 %v141
    %172 = vmatprep.subr.bf16.mxu0 0
    %173 = vmatpush1.bf16.msra.mxu0 %v142
    %174 = vmatprep.subr.bf16.mxu0 0
    %175 = vmatpush1.bf16.msra.mxu0 0
    %176 = vmatprep.subr.bf16.mxu0 0
    %177 = vmatpush1.bf16.msra.mxu0 0
    %178 = vmatprep.subr.bf16.mxu0 0
    %179 = vmatpush1.bf16.msra.mxu0 0
    %180 = vmatprep.subr.bf16.mxu0 0
    %181 = vmatpush1.bf16.msra.mxu0 0
    %182 = vmatprep.subr.bf16.mxu0 0
    %183 = vmatpush1.bf16.msra.mxu0 0
    %184 = vmatprep.subr.bf16.mxu0 0
    %185 = vmatpush1.bf16.msra.mxu0 0
    %186 = vmatprep.subr.bf16.mxu0 0
    %187 = vmatpush1.bf16.msra.mxu0 0
    %188 = vmatprep.subr.bf16.mxu0 0
    %189 = vmatpush1.bf16.msra.mxu0 0
    %190 = vmatprep.subr.bf16.mxu0 0
    %191 = vmatpush1.bf16.msra.mxu0 0
    %192 = vmatprep.subr.bf16.mxu0 0
    %193 = vmatpush1.bf16.msra.mxu0 0
    %194 = vmatprep.subr.bf16.mxu0 0
    %195 = vmatpush1.bf16.msra.mxu0 0
    %196 = vmatprep.subr.bf16.mxu0 0
    %197 = vmatpush1.bf16.msra.mxu0 0
    %198 = vmatprep.subr.bf16.mxu0 0
    %199 = vmatpush1.bf16.msra.mxu0 0
    %200 = vmatprep.subr.bf16.mxu0 0
    %201 = vmatpush1.bf16.msra.mxu0 0
    %202 = vmatprep.mubr.bf16.mxu0 0
    %203 = vmatmul.mubr.bf16.gmra.mrb[0].mxu0 %v147
    %v204 = vpop.f32.mrb[0].mxu0
    %v205 = vadd.f32 %v91, %v204
    %v206 = vpop.f32.mrb[0].mxu0
    %v207 = vpop.f32.mrb[0].mxu0
    %v208 = vadd.f32 %v91, %v207
    %v209 = vpop.f32.mrb[0].mxu0
    %210 = vmatprep.mubr.bf16.mxu0 0
    %211 = vmatmul.mubr.bf16.gmra.mrb[0].mxu0 %v150
    %v212 = vpop.f32.mrb[0].mxu0
    %v213 = vadd.f32 %v91, %v212
    %v214 = vpop.f32.mrb[0].mxu0
    %v215 = vpop.f32.mrb[0].mxu0
    %v216 = vadd.f32 %v91, %v215
    %v217 = vpop.f32.mrb[0].mxu0
    %218 = vmatprep.mubr.bf16.mxu0 0
    %219 = vmatmul.mubr.bf16.gmra.mrb[0].mxu0 %v153
    %v220 = vpop.f32.mrb[0].mxu0
    %v221 = vadd.f32 %v91, %v220
    %v222 = vpop.f32.mrb[0].mxu0
    %v223 = vpop.f32.mrb[0].mxu0
    %v224 = vadd.f32 %v91, %v223
    %v225 = vpop.f32.mrb[0].mxu0
    %226 = vmatprep.mubr.bf16.mxu0 0
    %227 = vmatmul.mubr.bf16.gmra.mrb[0].mxu0 %v156
    %v228 = vpop.f32.mrb[0].mxu0
    %v229 = vadd.f32 %v91, %v228
    %v230 = vpop.f32.mrb[0].mxu0
    %v231 = vpop.f32.mrb[0].mxu0
    %v232 = vadd.f32 %v91, %v231
    %v233 = vpop.f32.mrb[0].mxu0
    %234 = vmatprep.mubr.bf16.mxu0 0
    %235 = vmatmul.mubr.bf16.gmra.mrb[0].mxu0 %v159
    %v236 = vpop.f32.mrb[0].mxu0
    %v237 = vadd.f32 %v91, %v236
    %v238 = vpop.f32.mrb[0].mxu0
    %v239 = vpop.f32.mrb[0].mxu0
    %v240 = vadd.f32 %v91, %v239
    %v241 = vpop.f32.mrb[0].mxu0
    %242 = vmatprep.mubr.bf16.mxu0 0
    %243 = vmatmul.mubr.bf16.gmra.mrb[0].mxu0 %v162
    %v244 = vpop.f32.mrb[0].mxu0
    %v245 = vadd.f32 %v91, %v244
    %v246 = vpop.f32.mrb[0].mxu0
    %v247 = vpop.f32.mrb[0].mxu0
    %v248 = vadd.f32 %v91, %v247
    %v249 = vpop.f32.mrb[0].mxu0
    %250 = vmatprep.mubr.bf16.mxu0 0
    %251 = vmatmul.mubr.bf16.gmra.mrb[0].mxu0 %v165
    %v252 = vpop.f32.mrb[0].mxu0
    %v253 = vadd.f32 %v91, %v252
    %v254 = vpop.f32.mrb[0].mxu0
    %v255 = vpop.f32.mrb[0].mxu0
    %v256 = vadd.f32 %v91, %v255
    %v257 = vpop.f32.mrb[0].mxu0
    %258 = vmatprep.mubr.bf16.mxu0 0
    %259 = vmatmul.mubr.bf16.gmra.mrb[0].mxu0 %v168
    %v260 = vpop.f32.mrb[0].mxu0
    %v261 = vadd.f32 %v91, %v260
    %v262 = vpop.f32.mrb[0].mxu0
    %v263 = vpop.f32.mrb[0].mxu0
    %v264 = vadd.f32 %v91, %v263
    %v265 = vpop.f32.mrb[0].mxu0
    %266 = vdwg.mxu0
    %vm267 = vcmask 785408
    %268 = vst.msk [vmem:[#allocation2] sm:$0xff] %vm267, %v205
    %269 = vst.msk [vmem:[#allocation2 + $0x8] sm:$0xff] %vm267, %v208
    %270 = vst.msk [vmem:[#allocation2 + $0x10] sm:$0xff] %vm267, %v213
    %271 = vst.msk [vmem:[#allocation2 + $0x18] sm:$0xff] %vm267, %v216
    %272 = vst.msk [vmem:[#allocation2 + $0x20] sm:$0xff] %vm267, %v221
    %273 = vst.msk [vmem:[#allocation2 + $0x28] sm:$0xff] %vm267, %v224
    %274 = vst.msk [vmem:[#allocation2 + $0x30] sm:$0xff] %vm267, %v229
    %275 = vst.msk [vmem:[#allocation2 + $0x38] sm:$0xff] %vm267, %v232
    %276 = vst.msk [vmem:[#allocation2 + $0x40] sm:$0xff] %vm267, %v237
    %277 = vst.msk [vmem:[#allocation2 + $0x48] sm:$0xff] %vm267, %v240
    %278 = vst.msk [vmem:[#allocation2 + $0x50] sm:$0xff] %vm267, %v245
    %279 = vst.msk [vmem:[#allocation2 + $0x58] sm:$0xff] %vm267, %v248
    %280 = vst.msk [vmem:[#allocation2 + $0x60] sm:$0xff] %vm267, %v253
    %281 = vst.msk [vmem:[#allocation2 + $0x68] sm:$0xff] %vm267, %v256
    %282 = vst.msk [vmem:[#allocation2 + $0x70] sm:$0xff] %vm267, %v261
    %283 = vst.msk [vmem:[#allocation2 + $0x78] sm:$0xff] %vm267, %v264
    %v284 = vld [vmem:[%s4] sm:$0xff]
    %v285 = vld [vmem:[%s4 + $0x8] sm:$0xff]
    %v286 = vld [vmem:[%s4 + $0x10] sm:$0xff]
    %v287 = vld [vmem:[%s4 + $0x18] sm:$0xff]
    %v288 = vld [vmem:[%s5] sm:$0x1]
    %v289 = vld [vmem:[%s8] sm:$0x1]
    %s290 = sld [smem:[#allocation4]]
    %s291 = scalar_lea.vmem [#allocation2], %s290
    %v292 = vld [vmem:[%s291] sm:$0x1]
    %v294 = vsel %vm145, %v289, 0
    %296 = vmatprep.subr.mxu0 0.0
    %297 = vmatpush1.msra.mxu0 %v284
    %298 = vmatprep.subr.mxu0 0.0
    %299 = vmatpush1.msra.mxu0 %v285
    %300 = vmatprep.subr.mxu0 0.0
    %301 = vmatpush1.msra.mxu0 %v286
    %302 = vmatprep.subr.mxu0 0.0
    %303 = vmatpush1.msra.mxu0 %v287
    %304 = vmatprep.subr.mxu0 0.0
    %305 = vmatpush1.msra.mxu0 0.0
    %306 = vmatprep.subr.mxu0 0.0
    %307 = vmatpush1.msra.mxu0 0.0
    %308 = vmatprep.subr.mxu0 0.0
    %309 = vmatpush1.msra.mxu0 0.0
    %310 = vmatprep.subr.mxu0 0.0
    %311 = vmatpush1.msra.mxu0 0.0
    %312 = vmatprep.subr.mxu0 0.0
    %313 = vmatpush1.msra.mxu0 0.0
    %314 = vmatprep.subr.mxu0 0.0
    %315 = vmatpush1.msra.mxu0 0.0
    %316 = vmatprep.subr.mxu0 0.0
    %317 = vmatpush1.msra.mxu0 0.0
    %318 = vmatprep.subr.mxu0 0.0
    %319 = vmatpush1.msra.mxu0 0.0
    %320 = vmatprep.subr.mxu0 0.0
    %321 = vmatpush1.msra.mxu0 0.0
    %322 = vmatprep.subr.mxu0 0.0
    %323 = vmatpush1.msra.mxu0 0.0
    %324 = vmatprep.subr.mxu0 0.0
    %325 = vmatpush1.msra.mxu0 0.0
    %326 = vmatprep.subr.mxu0 0.0
    %327 = vmatpush1.msra.mxu0 0.0
    %328 = vmatprep.subr.mxu0 0.0
    %329 = vmatpush1.msra.mxu0 0.0
    %330 = vmatprep.subr.mxu0 0.0
    %331 = vmatpush1.msra.mxu0 0.0
    %332 = vmatprep.subr.mxu0 0.0
    %333 = vmatpush1.msra.mxu0 0.0
    %334 = vmatprep.subr.mxu0 0.0
    %335 = vmatpush1.msra.mxu0 0.0
    %336 = vmatprep.subr.mxu0 0.0
    %337 = vmatpush1.msra.mxu0 0.0
    %338 = vmatprep.subr.mxu0 0.0
    %339 = vmatpush1.msra.mxu0 0.0
    %340 = vmatprep.subr.mxu0 0.0
    %341 = vmatpush1.msra.mxu0 0.0
    %342 = vmatprep.subr.mxu0 0.0
    %343 = vmatpush1.msra.mxu0 0.0
    %344 = vmatprep.subr.mxu0 0.0
    %345 = vmatpush1.msra.mxu0 0.0
    %346 = vmatprep.subr.mxu0 0.0
    %347 = vmatpush1.msra.mxu0 0.0
    %348 = vmatprep.subr.mxu0 0.0
    %349 = vmatpush1.msra.mxu0 0.0
    %350 = vmatprep.subr.mxu0 0.0
    %351 = vmatpush1.msra.mxu0 0.0
    %352 = vmatprep.subr.mxu0 0.0
    %353 = vmatpush1.msra.mxu0 0.0
    %354 = vmatprep.subr.mxu0 0.0
    %355 = vmatpush1.msra.mxu0 0.0
    %356 = vmatprep.subr.mxu0 0.0
    %357 = vmatpush1.msra.mxu0 0.0
    %358 = vmatprep.subr.mxu0 0.0
    %359 = vmatpush1.msra.mxu0 0.0
    %360 = vmatprep.mubr.f32.mxu0 0.0
    %361 = vmatmul.mubr.f32.gmra.mrb[0].mxu0 %v294
    %v362 = vpop.f32.mrb[0].mxu0
    %v363 = vadd.f32 %v288, %v362
    %v364 = vpop.f32.mrb[0].mxu0
    %365 = vdwg.mxu0
    %v366 = vadd.f32 %v292, %v363
    %v367 = vxor.u32 %v366, 2147483648
    %v368 = vmul.f32 %v367, 1.442695
    %v369 = vpow.pop %v368
    %v370 = vadd.f32 %v369, 1.0
    %v371 = vrcp.pop %v370
    %v372 = vmul.f32 1.0, %v371
    %374 = vrot.lane.b32.xlu0 %v363, 64
    %v375 = vpop.permute.xlu0 %374
    %v377 = vmul.f32 %v372, %v375
    %379 = vrot.lane.b32.xlu0 %v377, 64
    %v380 = vpop.permute.xlu0 %379
    %v382 = vadd.f32 %v292, %v380
    %v383 = vtanh.pop %v382
    %v384 = vsub.f32 1.0, %v372
    %386 = vrot.lane.b32.xlu0 %v383, 96
    %v387 = vpop.permute.xlu0 %386
    %v389 = vmul.f32 %v384, %v387
    %v390 = vlaneseq
    %v391 = vshrl.u32 %v390, 7
    %v392 = vsub.s32 0, %v391
    %v393 = vrot.slane %v289, %v392
    %394 = vrot.lane.b32.xlu0 %v393, 32
    %v395 = vpop.permute.xlu0 %394
    %v397 = vmul.f32 %v372, %v395
    %v398 = vadd.f32 %v389, %v397
    %400 = vrot.lane.b32.xlu0 %v398, 96
    %v401 = vpop.permute.xlu0 %400
    %vm403 = vcmask 253952
    %404 = vst.msk [vmem:[#allocation3] sm:$0x1] %vm403, %v401
    %s405 = sld [smem:[#allocation4 + $0x1]]
    %s406 = scalar_lea.vmem [#allocation2], %s405
    %v407 = vld [vmem:[%s406] sm:$0x1]
    %v408 = vsel %vm145, %v401, 0
    %410 = vmatprep.subr.mxu0 0.0
    %411 = vmatpush1.msra.mxu0 %v284
    %412 = vmatprep.subr.mxu0 0.0
    %413 = vmatpush1.msra.mxu0 %v285
    %414 = vmatprep.subr.mxu0 0.0
    %415 = vmatpush1.msra.mxu0 %v286
    %416 = vmatprep.subr.mxu0 0.0
    %417 = vmatpush1.msra.mxu0 %v287
    %418 = vmatprep.subr.mxu0 0.0
    %419 = vmatpush1.msra.mxu0 0.0
    %420 = vmatprep.subr.mxu0 0.0
    %421 = vmatpush1.msra.mxu0 0.0
    %422 = vmatprep.subr.mxu0 0.0
    %423 = vmatpush1.msra.mxu0 0.0
    %424 = vmatprep.subr.mxu0 0.0
    %425 = vmatpush1.msra.mxu0 0.0
    %426 = vmatprep.subr.mxu0 0.0
    %427 = vmatpush1.msra.mxu0 0.0
    %428 = vmatprep.subr.mxu0 0.0
    %429 = vmatpush1.msra.mxu0 0.0
    %430 = vmatprep.subr.mxu0 0.0
    %431 = vmatpush1.msra.mxu0 0.0
    %432 = vmatprep.subr.mxu0 0.0
    %433 = vmatpush1.msra.mxu0 0.0
    %434 = vmatprep.subr.mxu0 0.0
    %435 = vmatpush1.msra.mxu0 0.0
    %436 = vmatprep.subr.mxu0 0.0
    %437 = vmatpush1.msra.mxu0 0.0
    %438 = vmatprep.subr.mxu0 0.0
    %439 = vmatpush1.msra.mxu0 0.0
    %440 = vmatprep.subr.mxu0 0.0
    %441 = vmatpush1.msra.mxu0 0.0
    %442 = vmatprep.subr.mxu0 0.0
    %443 = vmatpush1.msra.mxu0 0.0
    %444 = vmatprep.subr.mxu0 0.0
    %445 = vmatpush1.msra.mxu0 0.0
    %446 = vmatprep.subr.mxu0 0.0
    %447 = vmatpush1.msra.mxu0 0.0
    %448 = vmatprep.subr.mxu0 0.0
    %449 = vmatpush1.msra.mxu0 0.0
    %450 = vmatprep.subr.mxu0 0.0
    %451 = vmatpush1.msra.mxu0 0.0
    %452 = vmatprep.subr.mxu0 0.0
    %453 = vmatpush1.msra.mxu0 0.0
    %454 = vmatprep.subr.mxu0 0.0
    %455 = vmatpush1.msra.mxu0 0.0
    %456 = vmatprep.subr.mxu0 0.0
    %457 = vmatpush1.msra.mxu0 0.0
    %458 = vmatprep.subr.mxu0 0.0
    %459 = vmatpush1.msra.mxu0 0.0
    %460 = vmatprep.subr.mxu0 0.0
    %461 = vmatpush1.msra.mxu0 0.0
    %462 = vmatprep.subr.mxu0 0.0
    %463 = vmatpush1.msra.mxu0 0.0
    %464 = vmatprep.subr.mxu0 0.0
    %465 = vmatpush1.msra.mxu0 0.0
    %466 = vmatprep.subr.mxu0 0.0
    %467 = vmatpush1.msra.mxu0 0.0
    %468 = vmatprep.subr.mxu0 0.0
    %469 = vmatpush1.msra.mxu0 0.0
    %470 = vmatprep.subr.mxu0 0.0
    %471 = vmatpush1.msra.mxu0 0.0
    %472 = vmatprep.subr.mxu0 0.0
    %473 = vmatpush1.msra.mxu0 0.0
    %474 = vmatprep.mubr.f32.mxu0 0.0
    %475 = vmatmul.mubr.f32.gmra.mrb[0].mxu0 %v408
    %v476 = vpop.f32.mrb[0].mxu0
    %v477 = vadd.f32 %v288, %v476
    %v478 = vpop.f32.mrb[0].mxu0
    %479 = vdwg.mxu0
    %v480 = vadd.f32 %v407, %v477
    %v481 = vxor.u32 %v480, 2147483648
    %v482 = vmul.f32 %v481, 1.442695
    %v483 = vpow.pop %v482
    %v484 = vadd.f32 %v483, 1.0
    %v485 = vrcp.pop %v484
    %v486 = vmul.f32 1.0, %v485
    %488 = vrot.lane.b32.xlu0 %v477, 64
    %v489 = vpop.permute.xlu0 %488
    %v491 = vmul.f32 %v486, %v489
    %493 = vrot.lane.b32.xlu0 %v491, 64
    %v494 = vpop.permute.xlu0 %493
    %v496 = vadd.f32 %v407, %v494
    %v497 = vtanh.pop %v496
    %v498 = vsub.f32 1.0, %v486
    %500 = vrot.lane.b32.xlu0 %v497, 96
    %v501 = vpop.permute.xlu0 %500
    %v503 = vmul.f32 %v498, %v501
    %v504 = vmul.f32 %v486, %v398
    %v505 = vadd.f32 %v503, %v504
    %507 = vrot.lane.b32.xlu0 %v505, 96
    %v508 = vpop.permute.xlu0 %507
    %510 = vst.msk [vmem:[#allocation3 + $0x1] sm:$0x1] %vm403, %v508
    %s511 = sld [smem:[#allocation4 + $0x2]]
    %s512 = scalar_lea.vmem [#allocation2], %s511
    %v513 = vld [vmem:[%s512] sm:$0x1]
    %v514 = vsel %vm145, %v508, 0
    %516 = vmatprep.subr.mxu0 0.0
    %517 = vmatpush1.msra.mxu0 %v284
    %518 = vmatprep.subr.mxu0 0.0
    %519 = vmatpush1.msra.mxu0 %v285
    %520 = vmatprep.subr.mxu0 0.0
    %521 = vmatpush1.msra.mxu0 %v286
    %522 = vmatprep.subr.mxu0 0.0
    %523 = vmatpush1.msra.mxu0 %v287
    %524 = vmatprep.subr.mxu0 0.0
    %525 = vmatpush1.msra.mxu0 0.0
    %526 = vmatprep.subr.mxu0 0.0
    %527 = vmatpush1.msra.mxu0 0.0
    %528 = vmatprep.subr.mxu0 0.0
    %529 = vmatpush1.msra.mxu0 0.0
    %530 = vmatprep.subr.mxu0 0.0
    %531 = vmatpush1.msra.mxu0 0.0
    %532 = vmatprep.subr.mxu0 0.0
    %533 = vmatpush1.msra.mxu0 0.0
    %534 = vmatprep.subr.mxu0 0.0
    %535 = vmatpush1.msra.mxu0 0.0
    %536 = vmatprep.subr.mxu0 0.0
    %537 = vmatpush1.msra.mxu0 0.0
    %538 = vmatprep.subr.mxu0 0.0
    %539 = vmatpush1.msra.mxu0 0.0
    %540 = vmatprep.subr.mxu0 0.0
    %541 = vmatpush1.msra.mxu0 0.0
    %542 = vmatprep.subr.mxu0 0.0
    %543 = vmatpush1.msra.mxu0 0.0
    %544 = vmatprep.subr.mxu0 0.0
    %545 = vmatpush1.msra.mxu0 0.0
    %546 = vmatprep.subr.mxu0 0.0
    %547 = vmatpush1.msra.mxu0 0.0
    %548 = vmatprep.subr.mxu0 0.0
    %549 = vmatpush1.msra.mxu0 0.0
    %550 = vmatprep.subr.mxu0 0.0
    %551 = vmatpush1.msra.mxu0 0.0
    %552 = vmatprep.subr.mxu0 0.0
    %553 = vmatpush1.msra.mxu0 0.0
    %554 = vmatprep.subr.mxu0 0.0
    %555 = vmatpush1.msra.mxu0 0.0
    %556 = vmatprep.subr.mxu0 0.0
    %557 = vmatpush1.msra.mxu0 0.0
    %558 = vmatprep.subr.mxu0 0.0
    %559 = vmatpush1.msra.mxu0 0.0
    %560 = vmatprep.subr.mxu0 0.0
    %561 = vmatpush1.msra.mxu0 0.0
    %562 = vmatprep.subr.mxu0 0.0
    %563 = vmatpush1.msra.mxu0 0.0
    %564 = vmatprep.subr.mxu0 0.0
    %565 = vmatpush1.msra.mxu0 0.0
    %566 = vmatprep.subr.mxu0 0.0
    %567 = vmatpush1.msra.mxu0 0.0
    %568 = vmatprep.subr.mxu0 0.0
    %569 = vmatpush1.msra.mxu0 0.0
    %570 = vmatprep.subr.mxu0 0.0
    %571 = vmatpush1.msra.mxu0 0.0
    %572 = vmatprep.subr.mxu0 0.0
    %573 = vmatpush1.msra.mxu0 0.0
    %574 = vmatprep.subr.mxu0 0.0
    %575 = vmatpush1.msra.mxu0 0.0
    %576 = vmatprep.subr.mxu0 0.0
    %577 = vmatpush1.msra.mxu0 0.0
    %578 = vmatprep.subr.mxu0 0.0
    %579 = vmatpush1.msra.mxu0 0.0
    %580 = vmatprep.mubr.f32.mxu0 0.0
    %581 = vmatmul.mubr.f32.gmra.mrb[0].mxu0 %v514
    %v582 = vpop.f32.mrb[0].mxu0
    %v583 = vadd.f32 %v288, %v582
    %v584 = vpop.f32.mrb[0].mxu0
    %585 = vdwg.mxu0
    %v586 = vadd.f32 %v513, %v583
    %v587 = vxor.u32 %v586, 2147483648
    %v588 = vmul.f32 %v587, 1.442695
    %v589 = vpow.pop %v588
    %v590 = vadd.f32 %v589, 1.0
    %v591 = vrcp.pop %v590
    %v592 = vmul.f32 1.0, %v591
    %594 = vrot.lane.b32.xlu0 %v583, 64
    %v595 = vpop.permute.xlu0 %594
    %v597 = vmul.f32 %v592, %v595
    %599 = vrot.lane.b32.xlu0 %v597, 64
    %v600 = vpop.permute.xlu0 %599
    %v602 = vadd.f32 %v513, %v600
    %v603 = vtanh.pop %v602
    %v604 = vsub.f32 1.0, %v592
    %606 = vrot.lane.b32.xlu0 %v603, 96
    %v607 = vpop.permute.xlu0 %606
    %v609 = vmul.f32 %v604, %v607
    %v610 = vmul.f32 %v592, %v505
    %v611 = vadd.f32 %v609, %v610
    %613 = vrot.lane.b32.xlu0 %v611, 96
    %v614 = vpop.permute.xlu0 %613
    %616 = vst.msk [vmem:[#allocation3 + $0x2] sm:$0x1] %vm403, %v614
    %s617 = sld [smem:[#allocation4 + $0x3]]
    %s618 = scalar_lea.vmem [#allocation2], %s617
    %v619 = vld [vmem:[%s618] sm:$0x1]
    %v620 = vsel %vm145, %v614, 0
    %622 = vmatprep.subr.mxu0 0.0
    %623 = vmatpush1.msra.mxu0 %v284
    %624 = vmatprep.subr.mxu0 0.0
    %625 = vmatpush1.msra.mxu0 %v285
    %626 = vmatprep.subr.mxu0 0.0
    %627 = vmatpush1.msra.mxu0 %v286
    %628 = vmatprep.subr.mxu0 0.0
    %629 = vmatpush1.msra.mxu0 %v287
    %630 = vmatprep.subr.mxu0 0.0
    %631 = vmatpush1.msra.mxu0 0.0
    %632 = vmatprep.subr.mxu0 0.0
    %633 = vmatpush1.msra.mxu0 0.0
    %634 = vmatprep.subr.mxu0 0.0
    %635 = vmatpush1.msra.mxu0 0.0
    %636 = vmatprep.subr.mxu0 0.0
    %637 = vmatpush1.msra.mxu0 0.0
    %638 = vmatprep.subr.mxu0 0.0
    %639 = vmatpush1.msra.mxu0 0.0
    %640 = vmatprep.subr.mxu0 0.0
    %641 = vmatpush1.msra.mxu0 0.0
    %642 = vmatprep.subr.mxu0 0.0
    %643 = vmatpush1.msra.mxu0 0.0
    %644 = vmatprep.subr.mxu0 0.0
    %645 = vmatpush1.msra.mxu0 0.0
    %646 = vmatprep.subr.mxu0 0.0
    %647 = vmatpush1.msra.mxu0 0.0
    %648 = vmatprep.subr.mxu0 0.0
    %649 = vmatpush1.msra.mxu0 0.0
    %650 = vmatprep.subr.mxu0 0.0
    %651 = vmatpush1.msra.mxu0 0.0
    %652 = vmatprep.subr.mxu0 0.0
    %653 = vmatpush1.msra.mxu0 0.0
    %654 = vmatprep.subr.mxu0 0.0
    %655 = vmatpush1.msra.mxu0 0.0
    %656 = vmatprep.subr.mxu0 0.0
    %657 = vmatpush1.msra.mxu0 0.0
    %658 = vmatprep.subr.mxu0 0.0
    %659 = vmatpush1.msra.mxu0 0.0
    %660 = vmatprep.subr.mxu0 0.0
    %661 = vmatpush1.msra.mxu0 0.0
    %662 = vmatprep.subr.mxu0 0.0
    %663 = vmatpush1.msra.mxu0 0.0
    %664 = vmatprep.subr.mxu0 0.0
    %665 = vmatpush1.msra.mxu0 0.0
    %666 = vmatprep.subr.mxu0 0.0
    %667 = vmatpush1.msra.mxu0 0.0
    %668 = vmatprep.subr.mxu0 0.0
    %669 = vmatpush1.msra.mxu0 0.0
    %670 = vmatprep.subr.mxu0 0.0
    %671 = vmatpush1.msra.mxu0 0.0
    %672 = vmatprep.subr.mxu0 0.0
    %673 = vmatpush1.msra.mxu0 0.0
    %674 = vmatprep.subr.mxu0 0.0
    %675 = vmatpush1.msra.mxu0 0.0
    %676 = vmatprep.subr.mxu0 0.0
    %677 = vmatpush1.msra.mxu0 0.0
    %678 = vmatprep.subr.mxu0 0.0
    %679 = vmatpush1.msra.mxu0 0.0
    %680 = vmatprep.subr.mxu0 0.0
    %681 = vmatpush1.msra.mxu0 0.0
    %682 = vmatprep.subr.mxu0 0.0
    %683 = vmatpush1.msra.mxu0 0.0
    %684 = vmatprep.subr.mxu0 0.0
    %685 = vmatpush1.msra.mxu0 0.0
    %686 = vmatprep.mubr.f32.mxu0 0.0
    %687 = vmatmul.mubr.f32.gmra.mrb[0].mxu0 %v620
    %v688 = vpop.f32.mrb[0].mxu0
    %v689 = vadd.f32 %v288, %v688
    %v690 = vpop.f32.mrb[0].mxu0
    %691 = vdwg.mxu0
    %v692 = vadd.f32 %v619, %v689
    %v693 = vxor.u32 %v692, 2147483648
    %v694 = vmul.f32 %v693, 1.442695
    %v695 = vpow.pop %v694
    %v696 = vadd.f32 %v695, 1.0
    %v697 = vrcp.pop %v696
    %v698 = vmul.f32 1.0, %v697
    %700 = vrot.lane.b32.xlu0 %v689, 64
    %v701 = vpop.permute.xlu0 %700
    %v703 = vmul.f32 %v698, %v701
    %705 = vrot.lane.b32.xlu0 %v703, 64
    %v706 = vpop.permute.xlu0 %705
    %v708 = vadd.f32 %v619, %v706
    %v709 = vtanh.pop %v708
    %v710 = vsub.f32 1.0, %v698
    %712 = vrot.lane.b32.xlu0 %v709, 96
    %v713 = vpop.permute.xlu0 %712
    %v715 = vmul.f32 %v710, %v713
    %v716 = vmul.f32 %v698, %v611
    %v717 = vadd.f32 %v715, %v716
    %719 = vrot.lane.b32.xlu0 %v717, 96
    %v720 = vpop.permute.xlu0 %719
    %722 = vst.msk [vmem:[#allocation3 + $0x3] sm:$0x1] %vm403, %v720
    %s723 = sld [smem:[#allocation4 + $0x4]]
    %s724 = scalar_lea.vmem [#allocation2], %s723
    %v725 = vld [vmem:[%s724] sm:$0x1]
    %v726 = vsel %vm145, %v720, 0
    %728 = vmatprep.subr.mxu0 0.0
    %729 = vmatpush1.msra.mxu0 %v284
    %730 = vmatprep.subr.mxu0 0.0
    %731 = vmatpush1.msra.mxu0 %v285
    %732 = vmatprep.subr.mxu0 0.0
    %733 = vmatpush1.msra.mxu0 %v286
    %734 = vmatprep.subr.mxu0 0.0
    %735 = vmatpush1.msra.mxu0 %v287
    %736 = vmatprep.subr.mxu0 0.0
    %737 = vmatpush1.msra.mxu0 0.0
    %738 = vmatprep.subr.mxu0 0.0
    %739 = vmatpush1.msra.mxu0 0.0
    %740 = vmatprep.subr.mxu0 0.0
    %741 = vmatpush1.msra.mxu0 0.0
    %742 = vmatprep.subr.mxu0 0.0
    %743 = vmatpush1.msra.mxu0 0.0
    %744 = vmatprep.subr.mxu0 0.0
    %745 = vmatpush1.msra.mxu0 0.0
    %746 = vmatprep.subr.mxu0 0.0
    %747 = vmatpush1.msra.mxu0 0.0
    %748 = vmatprep.subr.mxu0 0.0
    %749 = vmatpush1.msra.mxu0 0.0
    %750 = vmatprep.subr.mxu0 0.0
    %751 = vmatpush1.msra.mxu0 0.0
    %752 = vmatprep.subr.mxu0 0.0
    %753 = vmatpush1.msra.mxu0 0.0
    %754 = vmatprep.subr.mxu0 0.0
    %755 = vmatpush1.msra.mxu0 0.0
    %756 = vmatprep.subr.mxu0 0.0
    %757 = vmatpush1.msra.mxu0 0.0
    %758 = vmatprep.subr.mxu0 0.0
    %759 = vmatpush1.msra.mxu0 0.0
    %760 = vmatprep.subr.mxu0 0.0
    %761 = vmatpush1.msra.mxu0 0.0
    %762 = vmatprep.subr.mxu0 0.0
    %763 = vmatpush1.msra.mxu0 0.0
    %764 = vmatprep.subr.mxu0 0.0
    %765 = vmatpush1.msra.mxu0 0.0
    %766 = vmatprep.subr.mxu0 0.0
    %767 = vmatpush1.msra.mxu0 0.0
    %768 = vmatprep.subr.mxu0 0.0
    %769 = vmatpush1.msra.mxu0 0.0
    %770 = vmatprep.subr.mxu0 0.0
    %771 = vmatpush1.msra.mxu0 0.0
    %772 = vmatprep.subr.mxu0 0.0
    %773 = vmatpush1.msra.mxu0 0.0
    %774 = vmatprep.subr.mxu0 0.0
    %775 = vmatpush1.msra.mxu0 0.0
    %776 = vmatprep.subr.mxu0 0.0
    %777 = vmatpush1.msra.mxu0 0.0
    %778 = vmatprep.subr.mxu0 0.0
    %779 = vmatpush1.msra.mxu0 0.0
    %780 = vmatprep.subr.mxu0 0.0
    %781 = vmatpush1.msra.mxu0 0.0
    %782 = vmatprep.subr.mxu0 0.0
    %783 = vmatpush1.msra.mxu0 0.0
    %784 = vmatprep.subr.mxu0 0.0
    %785 = vmatpush1.msra.mxu0 0.0
    %786 = vmatprep.subr.mxu0 0.0
    %787 = vmatpush1.msra.mxu0 0.0
    %788 = vmatprep.subr.mxu0 0.0
    %789 = vmatpush1.msra.mxu0 0.0
    %790 = vmatprep.subr.mxu0 0.0
    %791 = vmatpush1.msra.mxu0 0.0
    %792 = vmatprep.mubr.f32.mxu0 0.0
    %793 = vmatmul.mubr.f32.gmra.mrb[0].mxu0 %v726
    %v794 = vpop.f32.mrb[0].mxu0
    %v795 = vadd.f32 %v288, %v794
    %v796 = vpop.f32.mrb[0].mxu0
    %797 = vdwg.mxu0
    %v798 = vadd.f32 %v725, %v795
    %v799 = vxor.u32 %v798, 2147483648
    %v800 = vmul.f32 %v799, 1.442695
    %v801 = vpow.pop %v800
    %v802 = vadd.f32 %v801, 1.0
    %v803 = vrcp.pop %v802
    %v804 = vmul.f32 1.0, %v803
    %806 = vrot.lane.b32.xlu0 %v795, 64
    %v807 = vpop.permute.xlu0 %806
    %v809 = vmul.f32 %v804, %v807
    %811 = vrot.lane.b32.xlu0 %v809, 64
    %v812 = vpop.permute.xlu0 %811
    %v814 = vadd.f32 %v725, %v812
    %v815 = vtanh.pop %v814
    %v816 = vsub.f32 1.0, %v804
    %818 = vrot.lane.b32.xlu0 %v815, 96
    %v819 = vpop.permute.xlu0 %818
    %v821 = vmul.f32 %v816, %v819
    %v822 = vmul.f32 %v804, %v717
    %v823 = vadd.f32 %v821, %v822
    %825 = vrot.lane.b32.xlu0 %v823, 96
    %v826 = vpop.permute.xlu0 %825
    %828 = vst.msk [vmem:[#allocation3 + $0x4] sm:$0x1] %vm403, %v826
    %s829 = sld [smem:[#allocation4 + $0x5]]
    %s830 = scalar_lea.vmem [#allocation2], %s829
    %v831 = vld [vmem:[%s830] sm:$0x1]
    %v832 = vsel %vm145, %v826, 0
    %834 = vmatprep.subr.mxu0 0.0
    %835 = vmatpush1.msra.mxu0 %v284
    %836 = vmatprep.subr.mxu0 0.0
    %837 = vmatpush1.msra.mxu0 %v285
    %838 = vmatprep.subr.mxu0 0.0
    %839 = vmatpush1.msra.mxu0 %v286
    %840 = vmatprep.subr.mxu0 0.0
    %841 = vmatpush1.msra.mxu0 %v287
    %842 = vmatprep.subr.mxu0 0.0
    %843 = vmatpush1.msra.mxu0 0.0
    %844 = vmatprep.subr.mxu0 0.0
    %845 = vmatpush1.msra.mxu0 0.0
    %846 = vmatprep.subr.mxu0 0.0
    %847 = vmatpush1.msra.mxu0 0.0
    %848 = vmatprep.subr.mxu0 0.0
    %849 = vmatpush1.msra.mxu0 0.0
    %850 = vmatprep.subr.mxu0 0.0
    %851 = vmatpush1.msra.mxu0 0.0
    %852 = vmatprep.subr.mxu0 0.0
    %853 = vmatpush1.msra.mxu0 0.0
    %854 = vmatprep.subr.mxu0 0.0
    %855 = vmatpush1.msra.mxu0 0.0
    %856 = vmatprep.subr.mxu0 0.0
    %857 = vmatpush1.msra.mxu0 0.0
    %858 = vmatprep.subr.mxu0 0.0
    %859 = vmatpush1.msra.mxu0 0.0
    %860 = vmatprep.subr.mxu0 0.0
    %861 = vmatpush1.msra.mxu0 0.0
    %862 = vmatprep.subr.mxu0 0.0
    %863 = vmatpush1.msra.mxu0 0.0
    %864 = vmatprep.subr.mxu0 0.0
    %865 = vmatpush1.msra.mxu0 0.0
    %866 = vmatprep.subr.mxu0 0.0
    %867 = vmatpush1.msra.mxu0 0.0
    %868 = vmatprep.subr.mxu0 0.0
    %869 = vmatpush1.msra.mxu0 0.0
    %870 = vmatprep.subr.mxu0 0.0
    %871 = vmatpush1.msra.mxu0 0.0
    %872 = vmatprep.subr.mxu0 0.0
    %873 = vmatpush1.msra.mxu0 0.0
    %874 = vmatprep.subr.mxu0 0.0
    %875 = vmatpush1.msra.mxu0 0.0
    %876 = vmatprep.subr.mxu0 0.0
    %877 = vmatpush1.msra.mxu0 0.0
    %878 = vmatprep.subr.mxu0 0.0
    %879 = vmatpush1.msra.mxu0 0.0
    %880 = vmatprep.subr.mxu0 0.0
    %881 = vmatpush1.msra.mxu0 0.0
    %882 = vmatprep.subr.mxu0 0.0
    %883 = vmatpush1.msra.mxu0 0.0
    %884 = vmatprep.subr.mxu0 0.0
    %885 = vmatpush1.msra.mxu0 0.0
    %886 = vmatprep.subr.mxu0 0.0
    %887 = vmatpush1.msra.mxu0 0.0
    %888 = vmatprep.subr.mxu0 0.0
    %889 = vmatpush1.msra.mxu0 0.0
    %890 = vmatprep.subr.mxu0 0.0
    %891 = vmatpush1.msra.mxu0 0.0
    %892 = vmatprep.subr.mxu0 0.0
    %893 = vmatpush1.msra.mxu0 0.0
    %894 = vmatprep.subr.mxu0 0.0
    %895 = vmatpush1.msra.mxu0 0.0
    %896 = vmatprep.subr.mxu0 0.0
    %897 = vmatpush1.msra.mxu0 0.0
    %898 = vmatprep.mubr.f32.mxu0 0.0
    %899 = vmatmul.mubr.f32.gmra.mrb[0].mxu0 %v832
    %v900 = vpop.f32.mrb[0].mxu0
    %v901 = vadd.f32 %v288, %v900
    %v902 = vpop.f32.mrb[0].mxu0
    %903 = vdwg.mxu0
    %v904 = vadd.f32 %v831, %v901
    %v905 = vxor.u32 %v904, 2147483648
    %v906 = vmul.f32 %v905, 1.442695
    %v907 = vpow.pop %v906
    %v908 = vadd.f32 %v907, 1.0
    %v909 = vrcp.pop %v908
    %v910 = vmul.f32 1.0, %v909
    %912 = vrot.lane.b32.xlu0 %v901, 64
    %v913 = vpop.permute.xlu0 %912
    %v915 = vmul.f32 %v910, %v913
    %917 = vrot.lane.b32.xlu0 %v915, 64
    %v918 = vpop.permute.xlu0 %917
    %v920 = vadd.f32 %v831, %v918
    %v921 = vtanh.pop %v920
    %v922 = vsub.f32 1.0, %v910
    %924 = vrot.lane.b32.xlu0 %v921, 96
    %v925 = vpop.permute.xlu0 %924
    %v927 = vmul.f32 %v922, %v925
    %v928 = vmul.f32 %v910, %v823
    %v929 = vadd.f32 %v927, %v928
    %931 = vrot.lane.b32.xlu0 %v929, 96
    %v932 = vpop.permute.xlu0 %931
    %934 = vst.msk [vmem:[#allocation3 + $0x5] sm:$0x1] %vm403, %v932
    %s935 = sld [smem:[#allocation4 + $0x6]]
    %s936 = scalar_lea.vmem [#allocation2], %s935
    %v937 = vld [vmem:[%s936] sm:$0x1]
    %v938 = vsel %vm145, %v932, 0
    %940 = vmatprep.subr.mxu0 0.0
    %941 = vmatpush1.msra.mxu0 %v284
    %942 = vmatprep.subr.mxu0 0.0
    %943 = vmatpush1.msra.mxu0 %v285
    %944 = vmatprep.subr.mxu0 0.0
    %945 = vmatpush1.msra.mxu0 %v286
    %946 = vmatprep.subr.mxu0 0.0
    %947 = vmatpush1.msra.mxu0 %v287
    %948 = vmatprep.subr.mxu0 0.0
    %949 = vmatpush1.msra.mxu0 0.0
    %950 = vmatprep.subr.mxu0 0.0
    %951 = vmatpush1.msra.mxu0 0.0
    %952 = vmatprep.subr.mxu0 0.0
    %953 = vmatpush1.msra.mxu0 0.0
    %954 = vmatprep.subr.mxu0 0.0
    %955 = vmatpush1.msra.mxu0 0.0
    %956 = vmatprep.subr.mxu0 0.0
    %957 = vmatpush1.msra.mxu0 0.0
    %958 = vmatprep.subr.mxu0 0.0
    %959 = vmatpush1.msra.mxu0 0.0
    %960 = vmatprep.subr.mxu0 0.0
    %961 = vmatpush1.msra.mxu0 0.0
    %962 = vmatprep.subr.mxu0 0.0
    %963 = vmatpush1.msra.mxu0 0.0
    %964 = vmatprep.subr.mxu0 0.0
    %965 = vmatpush1.msra.mxu0 0.0
    %966 = vmatprep.subr.mxu0 0.0
    %967 = vmatpush1.msra.mxu0 0.0
    %968 = vmatprep.subr.mxu0 0.0
    %969 = vmatpush1.msra.mxu0 0.0
    %970 = vmatprep.subr.mxu0 0.0
    %971 = vmatpush1.msra.mxu0 0.0
    %972 = vmatprep.subr.mxu0 0.0
    %973 = vmatpush1.msra.mxu0 0.0
    %974 = vmatprep.subr.mxu0 0.0
    %975 = vmatpush1.msra.mxu0 0.0
    %976 = vmatprep.subr.mxu0 0.0
    %977 = vmatpush1.msra.mxu0 0.0
    %978 = vmatprep.subr.mxu0 0.0
    %979 = vmatpush1.msra.mxu0 0.0
    %980 = vmatprep.subr.mxu0 0.0
    %981 = vmatpush1.msra.mxu0 0.0
    %982 = vmatprep.subr.mxu0 0.0
    %983 = vmatpush1.msra.mxu0 0.0
    %984 = vmatprep.subr.mxu0 0.0
    %985 = vmatpush1.msra.mxu0 0.0
    %986 = vmatprep.subr.mxu0 0.0
    %987 = vmatpush1.msra.mxu0 0.0
    %988 = vmatprep.subr.mxu0 0.0
    %989 = vmatpush1.msra.mxu0 0.0
    %990 = vmatprep.subr.mxu0 0.0
    %991 = vmatpush1.msra.mxu0 0.0
    %992 = vmatprep.subr.mxu0 0.0
    %993 = vmatpush1.msra.mxu0 0.0
    %994 = vmatprep.subr.mxu0 0.0
    %995 = vmatpush1.msra.mxu0 0.0
    %996 = vmatprep.subr.mxu0 0.0
    %997 = vmatpush1.msra.mxu0 0.0
    %998 = vmatprep.subr.mxu0 0.0
    %999 = vmatpush1.msra.mxu0 0.0
    %1000 = vmatprep.subr.mxu0 0.0
    %1001 = vmatpush1.msra.mxu0 0.0
    %1002 = vmatprep.subr.mxu0 0.0
    %1003 = vmatpush1.msra.mxu0 0.0
    %1004 = vmatprep.mubr.f32.mxu0 0.0
    %1005 = vmatmul.mubr.f32.gmra.mrb[0].mxu0 %v938
    %v1006 = vpop.f32.mrb[0].mxu0
    %v1007 = vadd.f32 %v288, %v1006
    %v1008 = vpop.f32.mrb[0].mxu0
    %1009 = vdwg.mxu0
    %v1010 = vadd.f32 %v937, %v1007
    %v1011 = vxor.u32 %v1010, 2147483648
    %v1012 = vmul.f32 %v1011, 1.442695
    %v1013 = vpow.pop %v1012
    %v1014 = vadd.f32 %v1013, 1.0
    %v1015 = vrcp.pop %v1014
    %v1016 = vmul.f32 1.0, %v1015
    %1018 = vrot.lane.b32.xlu0 %v1007, 64
    %v1019 = vpop.permute.xlu0 %1018
    %v1021 = vmul.f32 %v1016, %v1019
    %1023 = vrot.lane.b32.xlu0 %v1021, 64
    %v1024 = vpop.permute.xlu0 %1023
    %v1026 = vadd.f32 %v937, %v1024
    %v1027 = vtanh.pop %v1026
    %v1028 = vsub.f32 1.0, %v1016
    %1030 = vrot.lane.b32.xlu0 %v1027, 96
    %v1031 = vpop.permute.xlu0 %1030
    %v1033 = vmul.f32 %v1028, %v1031
    %v1034 = vmul.f32 %v1016, %v929
    %v1035 = vadd.f32 %v1033, %v1034
    %1037 = vrot.lane.b32.xlu0 %v1035, 96
    %v1038 = vpop.permute.xlu0 %1037
    %1040 = vst.msk [vmem:[#allocation3 + $0x6] sm:$0x1] %vm403, %v1038
    %s1041 = sld [smem:[#allocation4 + $0x7]]
    %s1042 = scalar_lea.vmem [#allocation2], %s1041
    %v1043 = vld [vmem:[%s1042] sm:$0x1]
    %v1044 = vsel %vm145, %v1038, 0
    %1046 = vmatprep.subr.mxu0 0.0
    %1047 = vmatpush1.msra.mxu0 %v284
    %1048 = vmatprep.subr.mxu0 0.0
    %1049 = vmatpush1.msra.mxu0 %v285
    %1050 = vmatprep.subr.mxu0 0.0
    %1051 = vmatpush1.msra.mxu0 %v286
    %1052 = vmatprep.subr.mxu0 0.0
    %1053 = vmatpush1.msra.mxu0 %v287
    %1054 = vmatprep.subr.mxu0 0.0
    %1055 = vmatpush1.msra.mxu0 0.0
    %1056 = vmatprep.subr.mxu0 0.0
    %1057 = vmatpush1.msra.mxu0 0.0
    %1058 = vmatprep.subr.mxu0 0.0
    %1059 = vmatpush1.msra.mxu0 0.0
    %1060 = vmatprep.subr.mxu0 0.0
    %1061 = vmatpush1.msra.mxu0 0.0
    %1062 = vmatprep.subr.mxu0 0.0
    %1063 = vmatpush1.msra.mxu0 0.0
    %1064 = vmatprep.subr.mxu0 0.0
    %1065 = vmatpush1.msra.mxu0 0.0
    %1066 = vmatprep.subr.mxu0 0.0
    %1067 = vmatpush1.msra.mxu0 0.0
    %1068 = vmatprep.subr.mxu0 0.0
    %1069 = vmatpush1.msra.mxu0 0.0
    %1070 = vmatprep.subr.mxu0 0.0
    %1071 = vmatpush1.msra.mxu0 0.0
    %1072 = vmatprep.subr.mxu0 0.0
    %1073 = vmatpush1.msra.mxu0 0.0
    %1074 = vmatprep.subr.mxu0 0.0
    %1075 = vmatpush1.msra.mxu0 0.0
    %1076 = vmatprep.subr.mxu0 0.0
    %1077 = vmatpush1.msra.mxu0 0.0
    %1078 = vmatprep.subr.mxu0 0.0
    %1079 = vmatpush1.msra.mxu0 0.0
    %1080 = vmatprep.subr.mxu0 0.0
    %1081 = vmatpush1.msra.mxu0 0.0
    %1082 = vmatprep.subr.mxu0 0.0
    %1083 = vmatpush1.msra.mxu0 0.0
    %1084 = vmatprep.subr.mxu0 0.0
    %1085 = vmatpush1.msra.mxu0 0.0
    %1086 = vmatprep.subr.mxu0 0.0
    %1087 = vmatpush1.msra.mxu0 0.0
    %1088 = vmatprep.subr.mxu0 0.0
    %1089 = vmatpush1.msra.mxu0 0.0
    %1090 = vmatprep.subr.mxu0 0.0
    %1091 = vmatpush1.msra.mxu0 0.0
    %1092 = vmatprep.subr.mxu0 0.0
    %1093 = vmatpush1.msra.mxu0 0.0
    %1094 = vmatprep.subr.mxu0 0.0
    %1095 = vmatpush1.msra.mxu0 0.0
    %1096 = vmatprep.subr.mxu0 0.0
    %1097 = vmatpush1.msra.mxu0 0.0
    %1098 = vmatprep.subr.mxu0 0.0
    %1099 = vmatpush1.msra.mxu0 0.0
    %1100 = vmatprep.subr.mxu0 0.0
    %1101 = vmatpush1.msra.mxu0 0.0
    %1102 = vmatprep.subr.mxu0 0.0
    %1103 = vmatpush1.msra.mxu0 0.0
    %1104 = vmatprep.subr.mxu0 0.0
    %1105 = vmatpush1.msra.mxu0 0.0
    %1106 = vmatprep.subr.mxu0 0.0
    %1107 = vmatpush1.msra.mxu0 0.0
    %1108 = vmatprep.subr.mxu0 0.0
    %1109 = vmatpush1.msra.mxu0 0.0
    %1110 = vmatprep.mubr.f32.mxu0 0.0
    %1111 = vmatmul.mubr.f32.gmra.mrb[0].mxu0 %v1044
    %v1112 = vpop.f32.mrb[0].mxu0
    %v1113 = vadd.f32 %v288, %v1112
    %v1114 = vpop.f32.mrb[0].mxu0
    %1115 = vdwg.mxu0
    %v1116 = vadd.f32 %v1043, %v1113
    %v1117 = vxor.u32 %v1116, 2147483648
    %v1118 = vmul.f32 %v1117, 1.442695
    %v1119 = vpow.pop %v1118
    %v1120 = vadd.f32 %v1119, 1.0
    %v1121 = vrcp.pop %v1120
    %v1122 = vmul.f32 1.0, %v1121
    %1124 = vrot.lane.b32.xlu0 %v1113, 64
    %v1125 = vpop.permute.xlu0 %1124
    %v1127 = vmul.f32 %v1122, %v1125
    %1129 = vrot.lane.b32.xlu0 %v1127, 64
    %v1130 = vpop.permute.xlu0 %1129
    %v1132 = vadd.f32 %v1043, %v1130
    %v1133 = vtanh.pop %v1132
    %v1134 = vsub.f32 1.0, %v1122
    %1136 = vrot.lane.b32.xlu0 %v1133, 96
    %v1137 = vpop.permute.xlu0 %1136
    %v1139 = vmul.f32 %v1134, %v1137
    %v1140 = vmul.f32 %v1122, %v1035
    %v1141 = vadd.f32 %v1139, %v1140
    %1143 = vrot.lane.b32.xlu0 %v1141, 96
    %v1144 = vpop.permute.xlu0 %1143
    %1146 = vst.msk [vmem:[#allocation3 + $0x7] sm:$0x1] %vm403, %v1144
    %1147 = vst.msk [vmem:[#allocation8] sm:$0x1] %vm403, %v1144
    %v1148 = vld [vmem:[#allocation3] sm:$0xff]
    %v1149 = vld [vmem:[%s6] sm:$0xf]
    %v1150 = vld [vmem:[%s6 + $0x4] sm:$0xf]
    %v1151 = vld [vmem:[%s6 + $0x8] sm:$0xf]
    %v1152 = vld [vmem:[%s6 + $0xc] sm:$0xf]
    %v1153 = vunpack.c.l.bf16 %v1149
    %v1154 = vunpack.c.l.bf16 %v1150
    %v1155 = vunpack.c.l.bf16 %v1151
    %v1156 = vunpack.c.l.bf16 %v1152
    %v1157 = vld [vmem:[%s7] sm:$0x1]
    %v1159 = vlaneseq
    %v1160 = vshrl.u32 %v1159, 7
    %v1161 = vsub.s32 0, %v1160
    %v1162 = vrot.slane %v1157, %v1161
    %v1165 = vsel %vm145, %v1148, 0
    %1167 = vmatprep.subr.mxu0 0.0
    %1168 = vmatpush1.msra.mxu0 %v1153
    %1169 = vmatprep.subr.mxu0 0.0
    %1170 = vmatpush1.msra.mxu0 %v1154
    %1171 = vmatprep.subr.mxu0 0.0
    %1172 = vmatpush1.msra.mxu0 %v1155
    %1173 = vmatprep.subr.mxu0 0.0
    %1174 = vmatpush1.msra.mxu0 %v1156
    %1175 = vmatprep.subr.mxu0 0.0
    %1176 = vmatpush1.msra.mxu0 0.0
    %1177 = vmatprep.subr.mxu0 0.0
    %1178 = vmatpush1.msra.mxu0 0.0
    %1179 = vmatprep.subr.mxu0 0.0
    %1180 = vmatpush1.msra.mxu0 0.0
    %1181 = vmatprep.subr.mxu0 0.0
    %1182 = vmatpush1.msra.mxu0 0.0
    %1183 = vmatprep.subr.mxu0 0.0
    %1184 = vmatpush1.msra.mxu0 0.0
    %1185 = vmatprep.subr.mxu0 0.0
    %1186 = vmatpush1.msra.mxu0 0.0
    %1187 = vmatprep.subr.mxu0 0.0
    %1188 = vmatpush1.msra.mxu0 0.0
    %1189 = vmatprep.subr.mxu0 0.0
    %1190 = vmatpush1.msra.mxu0 0.0
    %1191 = vmatprep.subr.mxu0 0.0
    %1192 = vmatpush1.msra.mxu0 0.0
    %1193 = vmatprep.subr.mxu0 0.0
    %1194 = vmatpush1.msra.mxu0 0.0
    %1195 = vmatprep.subr.mxu0 0.0
    %1196 = vmatpush1.msra.mxu0 0.0
    %1197 = vmatprep.subr.mxu0 0.0
    %1198 = vmatpush1.msra.mxu0 0.0
    %1199 = vmatprep.subr.mxu0 0.0
    %1200 = vmatpush1.msra.mxu0 0.0
    %1201 = vmatprep.subr.mxu0 0.0
    %1202 = vmatpush1.msra.mxu0 0.0
    %1203 = vmatprep.subr.mxu0 0.0
    %1204 = vmatpush1.msra.mxu0 0.0
    %1205 = vmatprep.subr.mxu0 0.0
    %1206 = vmatpush1.msra.mxu0 0.0
    %1207 = vmatprep.subr.mxu0 0.0
    %1208 = vmatpush1.msra.mxu0 0.0
    %1209 = vmatprep.subr.mxu0 0.0
    %1210 = vmatpush1.msra.mxu0 0.0
    %1211 = vmatprep.subr.mxu0 0.0
    %1212 = vmatpush1.msra.mxu0 0.0
    %1213 = vmatprep.subr.mxu0 0.0
    %1214 = vmatpush1.msra.mxu0 0.0
    %1215 = vmatprep.subr.mxu0 0.0
    %1216 = vmatpush1.msra.mxu0 0.0
    %1217 = vmatprep.subr.mxu0 0.0
    %1218 = vmatpush1.msra.mxu0 0.0
    %1219 = vmatprep.subr.mxu0 0.0
    %1220 = vmatpush1.msra.mxu0 0.0
    %1221 = vmatprep.subr.mxu0 0.0
    %1222 = vmatpush1.msra.mxu0 0.0
    %1223 = vmatprep.subr.mxu0 0.0
    %1224 = vmatpush1.msra.mxu0 0.0
    %1225 = vmatprep.subr.mxu0 0.0
    %1226 = vmatpush1.msra.mxu0 0.0
    %1227 = vmatprep.subr.mxu0 0.0
    %1228 = vmatpush1.msra.mxu0 0.0
    %1229 = vmatprep.subr.mxu0 0.0
    %1230 = vmatpush1.msra.mxu0 0.0
    %1231 = vmatprep.mubr.f32.mxu0 0.0
    %1232 = vmatmul.mubr.f32.gmra.mrb[0].mxu0 %v1165
    %v1233 = vpop.f32.mrb[0].mxu0
    %v1234 = vadd.f32 %v1162, %v1233
    %v1235 = vpop.f32.mrb[0].mxu0
    %1236 = vdwg.mxu0
    %1237 = vmax.xlane.f32.xlu0 %v1234
    %v1238 = vpop.xlane.xlu0 %1237
    %v1239 = vsub.f32 %v1234, %v1238
    %v1240 = vmul.f32 %v1239, 1.442695
    %v1241 = vpow.pop %v1240
    %1242 = vadd.xlane.f32.xlu0 %v1241
    %v1243 = vpop.xlane.xlu0 %1242
    %v1244 = vlog2.pop %v1243
    %v1245 = vmul.f32 %v1244, 0.6931472
    %v1246 = vadd.f32 %v1245, %v1238
    %v1247 = vsub.f32 %v1234, %v1246
    %1248 = vst [vmem:[#allocation7] sm:$0xff] %v1247
    // Predicated region
    $region42: #{tpu_custom_call.1} parent=1 // pred_check
      _
    $region43: #{tpu_custom_call.1} parent=1 // pred_check_branch
      %1250 = sbr.rel (0) target = $region45
    $region44: #{tpu_custom_call.1} parent=1 // pred_region
      %s1252 = ssub.s32 128, 128
      %1253 = vsyncadd [#allocation5], %s1252
      %s1255 = sshll.u32 [#allocation7], 4
      %s1256 = int_to_ptr.vmem [resolvable:$true] %s1255
      %1258 = dma.vmem_to_hbm [thread:$0]  %s1256, 128, %s9, [#allocation5]
    $region45: #{tpu_custom_call.1} parent=1 // pred_fallthru
      _
    // Predicated region
    $region46: #{tpu_custom_call.1} parent=1 // pred_check
      _
    $region47: #{tpu_custom_call.1} parent=1 // pred_check_branch
      %1260 = sbr.rel (0) target = $region49
    $region48: #{tpu_custom_call.1} parent=1 // pred_region
      %s1262 = ssub.s32 16, 16
      %1263 = vsyncadd [#allocation9], %s1262
      %s1265 = sshll.u32 [#allocation8], 4
      %s1266 = int_to_ptr.vmem [resolvable:$true] %s1265
      %1268 = dma.vmem_to_hbm [thread:$0]  %s1266, 16, %s10, [#allocation9]
    $region49: #{tpu_custom_call.1} parent=1 // pred_fallthru
      _
    // Predicated region
    $region50: #{tpu_custom_call.1} parent=1 // pred_check
      _
    $region51: #{tpu_custom_call.1} parent=1 // pred_check_branch
      %1270 = sbr.rel (0) target = $region53
    $region52: #{tpu_custom_call.1} parent=1 // pred_region
      %1271 = dma.done [#allocation5], 128
    $region53: #{tpu_custom_call.1} parent=1 // pred_fallthru
      _
    // Predicated region
    $region54: #{tpu_custom_call.1} parent=1 // pred_check
      _
    $region55: #{tpu_custom_call.1} parent=1 // pred_check_branch
      %1273 = sbr.rel (0) target = $region57
    $region56: #{tpu_custom_call.1} parent=1 // pred_region
      %1274 = dma.done [#allocation9], 16
    $region57: #{tpu_custom_call.1} parent=1 // pred_fallthru
      _
    %1275 = vsyncpa [#allocation5], 1
    %1276 = vsyncpa [#allocation9], 1
    %1277 = vsyncpa [#allocation6], 1

</llo_original>
